<compile_context>
chip_gen: v6e
topology: v6e:2x2x1
jax: 0.10.0
libtpu: 0.0.40
codegen_flags: <defaults>
</compile_context>

<pallas_src>
import jax
import jax.numpy as jnp
from jax import lax
from jax.experimental import pallas as pl
from jax.experimental.pallas import tpu as pltpu


# ---------------------------------------------------------------------------
# Synthetic "fs" structure (gives .size and .inodes[i].parent like the module)
# ---------------------------------------------------------------------------
class _Node:
    def __init__(self, parent):
        self.parent = parent


class FS:
    def __init__(self, size, n_types):
        self.size = size                       # hidden_dim
        # simple binary-tree parent structure; node 0 is the root (parent None)
        self.inodes = [_Node(None if i == 0 else (i - 1) // 2)
                       for i in range(n_types)]


# ---------------------------------------------------------------------------
# Glue: precompute path-accumulated embeddings (exactly _fs_map per type id)
# ---------------------------------------------------------------------------
def build_path_table(fs, emb, weight):
    rows = []
    for n in range(len(fs.inodes)):
        node = n
        w = jnp.float32(1.0)
        path = jnp.zeros((fs.size,), jnp.float32)
        while node is not None:
            path = path + w * emb[node]
            w = w * weight[node]
            node = fs.inodes[node].parent
        rows.append(path)
    return jnp.stack(rows)                     # (type_size, hidden)


# ---------------------------------------------------------------------------
# Pallas kernel: recurrent part of a single-layer LSTM.
# xg_ref holds the precomputed input projection (x @ W_ih^T + b_ih + b_hh),
# gate order (i, f, o, g), each gate occupying an Hg-wide block of lanes.
# Grid = (batch_blocks "parallel", time_blocks "arbitrary").
# ---------------------------------------------------------------------------
def lstm_kernel(xg_ref, whh_ref, out_ref, h_scr, c_scr):
    # Time is grid axis 1; reset state whenever the time index restarts so the
    # recurrence never carries across batch blocks.
    @pl.when(pl.program_id(1) == 0)
    def _():
        h_scr[...] = jnp.zeros_like(h_scr)
        c_scr[...] = jnp.zeros_like(c_scr)

    Hg = h_scr.shape[-1]                       # per-gate lane width
    T = xg_ref.shape[0]                        # fused timesteps per grid step

    def step(t, carry):
        # Read W_hh inside the step (not hoisted as one big vreg-live value
        # across the unrolled body -> bounded vreg pressure at large H).
        # TODO(synk): pltpu.matmul_push_rhs/_acc_lhs/_pop could keep W_hh
        # staged in the MXU across all T steps; omitted to guarantee clean
        # lowering on all chip generations.
        whh = whh_ref[...]                     # (Hg, 4*Hg) bf16
        xg = xg_ref[t].astype(jnp.float32)     # (B, 4*Hg) hoisted projection
        gates = xg + jnp.dot(h_scr[...].astype(jnp.bfloat16), whh,
                             preferred_element_type=jnp.float32)

        # gate order (i, f, o, g): one contiguous sigmoid over 3 gates + tanh
        ifo = jax.nn.sigmoid(gates[:, :3 * Hg])
        g_g = jnp.tanh(gates[:, 3 * Hg:])
        i_g = ifo[:, 0 * Hg:1 * Hg]
        f_g = ifo[:, 1 * Hg:2 * Hg]
        o_g = ifo[:, 2 * Hg:3 * Hg]

        c_new = f_g * c_scr[...] + i_g * g_g
        h_new = o_g * jnp.tanh(c_new)

        c_scr[...] = c_new
        h_scr[...] = h_new
        out_ref[t] = h_new.astype(out_ref.dtype)
        return carry

    lax.fori_loop(0, T, step, 0, unroll=min(8, T))


_GATE_PERM = [0, 1, 3, 2]      # torch (i, f, g, o) -> kernel (i, f, o, g)


def lstm_forward(emb_seq, w_ih, w_hh, b_ih, b_hh, *,
                 t_block=32, b_block=None, vmem_budget_bytes=32 << 20):
    """emb_seq: (S, B, H) f32; weights in PyTorch shapes (4H, H) / (4H,).

    Returns (S, B, H) f32, same layout as torch.nn.LSTM(batch_first=False).
    """
    S, B, H = emb_seq.shape

    # Per-gate lane width inside the kernel: keep the natural contiguous
    # layout when it is already friendly; otherwise pad each gate to 128 lanes.
    if H % 128 == 0 or 4 * H <= 128:
        Hg = H
    else:
        Hg = -(-H // 128) * 128

    # ---- hoisted input projection: bf16 operands, f32 accumulation ----------
    bias = (b_ih + b_hh).astype(jnp.float32)
    xg = jnp.einsum("sbh,gh->sbg",
                    emb_seq.astype(jnp.bfloat16), w_ih.astype(jnp.bfloat16),
                    preferred_element_type=jnp.float32) + bias   # (S, B, 4H)

    # ---- gate reorder (+ optional per-gate pad), stream as bf16 -------------
    xg = xg.reshape(S, B, 4, H)[:, :, _GATE_PERM, :]
    if Hg != H:
        xg = jnp.pad(xg, ((0, 0), (0, 0), (0, 0), (0, Hg - H)))
    xg = xg.reshape(S, B, 4 * Hg).astype(jnp.bfloat16)

    whh_t = jnp.transpose(w_hh).reshape(H, 4, H)[:, _GATE_PERM, :]
    if Hg != H:
        # zero-padded rows/cols keep the padded h/c lanes exactly 0 forever
        whh_t = jnp.pad(whh_t, ((0, Hg - H), (0, 0), (0, Hg - H)))
    whh_t = whh_t.reshape(Hg, 4 * Hg).astype(jnp.bfloat16)

    # ---- batch blocking: independent rows -> "parallel" axis (v7x 2 TCs) ----
    if b_block is None:
        b_block = B // 2 if (B % 16 == 0) else B
    assert B % b_block == 0 and (b_block % 8 == 0 or b_block == B)
    Bt = b_block

    # ---- time blocking: fuse T steps per grid step, prefer T | S ------------
    T = min(t_block, S)
    for cand in range(T, max(T // 2, 1) - 1, -1):
        if S % cand == 0:
            T = cand
            break

    # ---- VMEM budget: xg/out double-buffered bf16, W_hh single-buffered,
    #      f32 h/c scratch.  Cap T so it fits (v7x 64 MiB phys / 32 MiB scoped,
    #      v5e 16 MiB scoped default is raised via vmem_limit_bytes below).
    fixed = Hg * (4 * Hg) * 2 + 2 * Bt * Hg * 4
    per_t = 2 * Bt * (4 * Hg) * 2 + 2 * Bt * Hg * 2
    while T > 1 and fixed + T * per_t > vmem_budget_bytes:
        T = max(T // 2, 1)
    need = fixed + T * per_t
    vmem_limit = min(max(int(1.5 * need) + (4 << 20), 16 << 20), 48 << 20)

    S_pad = -(-S // T) * T
    if S_pad != S:
        # trailing zero-xg steps are inert for the real output rows
        xg = jnp.pad(xg, ((0, S_pad - S), (0, 0), (0, 0)))

    out = pl.pallas_call(
        lstm_kernel,
        out_shape=jax.ShapeDtypeStruct((S_pad, B, Hg), jnp.bfloat16),
        grid_spec=pltpu.PrefetchScalarGridSpec(
            num_scalar_prefetch=0,
            grid=(B // Bt, S_pad // T),
            in_specs=[
                pl.BlockSpec((T, Bt, 4 * Hg), lambda b, t: (t, b, 0)),
                # grid-invariant weight: single-buffered
                pl.BlockSpec((Hg, 4 * Hg), lambda b, t: (0, 0),
                             pipeline_mode=pl.Buffered(1)),
            ],
            out_specs=pl.BlockSpec((T, Bt, Hg), lambda b, t: (t, b, 0)),
            scratch_shapes=[
                pltpu.VMEM((Bt, Hg), jnp.float32),   # h_t carry
                pltpu.VMEM((Bt, Hg), jnp.float32),   # c_t carry
            ],
        ),
        compiler_params=pltpu.CompilerParams(
            dimension_semantics=("parallel", "arbitrary"),
            vmem_limit_bytes=vmem_limit),
    )(xg, whh_t)

    return out[:S, :, :H].astype(jnp.float32)


# ---------------------------------------------------------------------------
# Full forward, mirroring LSTMfs_.forward
# ---------------------------------------------------------------------------
def lstmfs_forward(event_seqs, params, fs):
    # event_seqs: (batch, seq) int32
    path_table = build_path_table(fs, params["emb"], params["weight"])
    es_t = jnp.transpose(event_seqs, (1, 0))            # (seq, batch)
    emb_seq = path_table[es_t]                           # (seq, batch, hidden)
    output = lstm_forward(emb_seq,
                          params["w_ih"], params["w_hh"],
                          params["b_ih"], params["b_hh"])
    # NOTE: hidden2tag Linear exists in __init__ but is unused in forward.
    return output                                        # (seq, batch, hidden)


if __name__ == "__main__":
    key = jax.random.PRNGKey(0)
    hidden = 32
    type_size = 16
    batch = 8
    seq = 8

    fs = FS(hidden, type_size)

    k = jax.random.split(key, 7)
    bound = 1.0 / float(hidden) ** 0.5
    params = {
        "weight": jax.random.uniform(k[0], (type_size,), jnp.float32, -0.1, 0.1),
        "emb": jax.random.normal(k[1], (type_size, hidden), jnp.float32),
        "w_ih": jax.random.uniform(k[2], (4 * hidden, hidden), jnp.float32, -bound, bound),
        "w_hh": jax.random.uniform(k[3], (4 * hidden, hidden), jnp.float32, -bound, bound),
        "b_ih": jax.random.uniform(k[4], (4 * hidden,), jnp.float32, -bound, bound),
        "b_hh": jax.random.uniform(k[5], (4 * hidden,), jnp.float32, -bound, bound),
    }

    event_seqs = jax.random.randint(k[6], (batch, seq), 0, type_size, jnp.int32)

    output = lstmfs_forward(event_seqs, params, fs)
    output = jax.block_until_ready(output)
    print(output.shape)      # the module's forward prints output.shape
    print("KERNEL_OK")
</pallas_src>

<mosaic_0001>
module attributes {stable_mosaic.version = 11 : i64} {
  func.func @lstm_kernel(%arg0: i32, %arg1: i32, %arg2: memref<8x8x128xbf16, #tpu.memory_space<vmem>>, %arg3: memref<32x128xbf16, #tpu.memory_space<vmem>>, %arg4: memref<8x8x32xbf16, #tpu.memory_space<vmem>>, %arg5: memref<8x32xf32, #tpu.memory_space<vmem>>, %arg6: memref<8x32xf32, #tpu.memory_space<vmem>>) attributes {dimension_semantics = [#tpu.dimension_semantics<parallel>, #tpu.dimension_semantics<arbitrary>], iteration_bounds = array<i64: 1, 1>, scalar_prefetch = 0 : i64, scratch_operands = 2 : i64, tpu.core_type = #tpu.core_type<tc>, window_params = [{transform_indices = @transform_0, window_bounds = array<i64: 8, 8, 128>}, {pipeline_mode = #tpu.pipeline_mode<synchronous>, transform_indices = @transform_1, window_bounds = array<i64: 32, 128>}, {transform_indices = @transform_2, window_bounds = array<i64: 8, 8, 32>}]} {
    %c0_i32 = arith.constant 0 : i32
    %0 = arith.cmpi eq, %arg1, %c0_i32 : i32
    %1 = arith.extui %0 : i1 to i32
    %c0_i32_0 = arith.constant 0 : i32
    %2 = arith.cmpi ne, %1, %c0_i32_0 : i32
    scf.if %2 {
      %cst_128 = arith.constant 0.000000e+00 : f32
      %267 = vector.broadcast %cst_128 : f32 to vector<8x32xf32>
      %c0_129 = arith.constant 0 : index
      %c0_130 = arith.constant 0 : index
      %268 = vector.load %arg5[%c0_129, %c0_130] : memref<8x32xf32, #tpu.memory_space<vmem>>, vector<8x32xf32>
      tpu.vector_store %arg5[%c0_129, %c0_130], %267 {strides = array<i32>} : memref<8x32xf32, #tpu.memory_space<vmem>>, vector<8x32xf32>,
      %cst_131 = arith.constant 0.000000e+00 : f32
      %269 = vector.broadcast %cst_131 : f32 to vector<8x32xf32>
      %c0_132 = arith.constant 0 : index
      %c0_133 = arith.constant 0 : index
      %270 = vector.load %arg6[%c0_132, %c0_133] : memref<8x32xf32, #tpu.memory_space<vmem>>, vector<8x32xf32>
      tpu.vector_store %arg6[%c0_132, %c0_133], %269 {strides = array<i32>} : memref<8x32xf32, #tpu.memory_space<vmem>>, vector<8x32xf32>,
    } else {
    }
    %c0_i32_1 = arith.constant 0 : i32
    %c0 = arith.constant 0 : index
    %c0_2 = arith.constant 0 : index
    %3 = vector.load %arg3[%c0, %c0_2] : memref<32x128xbf16, #tpu.memory_space<vmem>>, vector<32x128xbf16>
    %4 = arith.index_cast %c0_i32_1 : i32 to index
    %c0_3 = arith.constant 0 : index
    %c0_4 = arith.constant 0 : index
    %5 = vector.load %arg2[%4, %c0_3, %c0_4] : memref<8x8x128xbf16, #tpu.memory_space<vmem>>, vector<1x8x128xbf16>
    %6 = vector.shape_cast %5 : vector<1x8x128xbf16> to vector<8x128xbf16>
    %7 = arith.extf %6 : vector<8x128xbf16> to vector<8x128xf32>
    %c0_5 = arith.constant 0 : index
    %c0_6 = arith.constant 0 : index
    %8 = vector.load %arg5[%c0_5, %c0_6] : memref<8x32xf32, #tpu.memory_space<vmem>>, vector<8x32xf32>
    %9 = arith.truncf %8 : vector<8x32xf32> to vector<8x32xbf16>
    %cst = arith.constant dense<0.000000e+00> : vector<8x128xf32>
    %10 = tpu.matmul %9, %3, %cst {dimension_numbers = #tpu.dot_dimension_numbers<[1], [0], [0], [1], [0, 0, 1, 1], [], []>} : vector<8x32xbf16>, vector<32x128xbf16>, vector<8x128xf32> -> vector<8x128xf32>
    %11 = arith.addf %7, %10 : vector<8x128xf32>
    %12 = vector.extract_strided_slice %11 {offsets = [0, 0], sizes = [8, 96], strides = [1, 1]} : vector<8x128xf32> to vector<8x96xf32>
    %13 = arith.negf %12 : vector<8x96xf32>
    %14 = math.exp %13 : vector<8x96xf32>
    %cst_7 = arith.constant 1.000000e+00 : f32
    %15 = vector.broadcast %cst_7 : f32 to vector<8x96xf32>
    %16 = arith.addf %15, %14 : vector<8x96xf32>
    %17 = arith.divf %15, %16 : vector<8x96xf32>
    %18 = vector.extract_strided_slice %11 {offsets = [0, 96], sizes = [8, 32], strides = [1, 1]} : vector<8x128xf32> to vector<8x32xf32>
    %19 = math.tanh %18 : vector<8x32xf32>
    %20 = vector.extract_strided_slice %17 {offsets = [0, 0], sizes = [8, 32], strides = [1, 1]} : vector<8x96xf32> to vector<8x32xf32>
    %21 = vector.extract_strided_slice %17 {offsets = [0, 32], sizes = [8, 32], strides = [1, 1]} : vector<8x96xf32> to vector<8x32xf32>
    %22 = vector.extract_strided_slice %17 {offsets = [0, 64], sizes = [8, 32], strides = [1, 1]} : vector<8x96xf32> to vector<8x32xf32>
    %c0_8 = arith.constant 0 : index
    %c0_9 = arith.constant 0 : index
    %23 = vector.load %arg6[%c0_8, %c0_9] : memref<8x32xf32, #tpu.memory_space<vmem>>, vector<8x32xf32>
    %24 = arith.mulf %21, %23 : vector<8x32xf32>
    %25 = arith.mulf %20, %19 : vector<8x32xf32>
    %26 = arith.addf %24, %25 : vector<8x32xf32>
    %27 = math.tanh %26 : vector<8x32xf32>
    %28 = arith.mulf %22, %27 : vector<8x32xf32>
    %c0_10 = arith.constant 0 : index
    %c0_11 = arith.constant 0 : index
    %29 = vector.load %arg6[%c0_10, %c0_11] : memref<8x32xf32, #tpu.memory_space<vmem>>, vector<8x32xf32>
    tpu.vector_store %arg6[%c0_10, %c0_11], %26 {strides = array<i32>} : memref<8x32xf32, #tpu.memory_space<vmem>>, vector<8x32xf32>,
    %c0_12 = arith.constant 0 : index
    %c0_13 = arith.constant 0 : index
    %30 = vector.load %arg5[%c0_12, %c0_13] : memref<8x32xf32, #tpu.memory_space<vmem>>, vector<8x32xf32>
    tpu.vector_store %arg5[%c0_12, %c0_13], %28 {strides = array<i32>} : memref<8x32xf32, #tpu.memory_space<vmem>>, vector<8x32xf32>,
    %31 = arith.truncf %28 : vector<8x32xf32> to vector<8x32xbf16>
    %32 = arith.index_cast %c0_i32_1 : i32 to index
    %c0_14 = arith.constant 0 : index
    %c0_15 = arith.constant 0 : index
    %33 = vector.load %arg4[%32, %c0_14, %c0_15] : memref<8x8x32xbf16, #tpu.memory_space<vmem>>, vector<1x8x32xbf16>
    %34 = vector.shape_cast %33 : vector<1x8x32xbf16> to vector<8x32xbf16>
    %35 = vector.shape_cast %31 : vector<8x32xbf16> to vector<1x8x32xbf16>
    tpu.vector_store %arg4[%32, %c0_14, %c0_15], %35 {strides = array<i32>} : memref<8x8x32xbf16, #tpu.memory_space<vmem>>, vector<1x8x32xbf16>,
    %c1_i32 = arith.constant 1 : i32
    %c0_16 = arith.constant 0 : index
    %c0_17 = arith.constant 0 : index
    %36 = vector.load %arg3[%c0_16, %c0_17] : memref<32x128xbf16, #tpu.memory_space<vmem>>, vector<32x128xbf16>
    %37 = arith.index_cast %c1_i32 : i32 to index
    %c0_18 = arith.constant 0 : index
    %c0_19 = arith.constant 0 : index
    %38 = vector.load %arg2[%37, %c0_18, %c0_19] : memref<8x8x128xbf16, #tpu.memory_space<vmem>>, vector<1x8x128xbf16>
    %39 = vector.shape_cast %38 : vector<1x8x128xbf16> to vector<8x128xbf16>
    %40 = arith.extf %39 : vector<8x128xbf16> to vector<8x128xf32>
    %c0_20 = arith.constant 0 : index
    %c0_21 = arith.constant 0 : index
    %41 = vector.load %arg5[%c0_20, %c0_21] : memref<8x32xf32, #tpu.memory_space<vmem>>, vector<8x32xf32>
    %42 = arith.truncf %41 : vector<8x32xf32> to vector<8x32xbf16>
    %cst_22 = arith.constant dense<0.000000e+00> : vector<8x128xf32>
    %43 = tpu.matmul %42, %36, %cst_22 {dimension_numbers = #tpu.dot_dimension_numbers<[1], [0], [0], [1], [0, 0, 1, 1], [], []>} : vector<8x32xbf16>, vector<32x128xbf16>, vector<8x128xf32> -> vector<8x128xf32>
    %44 = arith.addf %40, %43 : vector<8x128xf32>
    %45 = vector.extract_strided_slice %44 {offsets = [0, 0], sizes = [8, 96], strides = [1, 1]} : vector<8x128xf32> to vector<8x96xf32>
    %46 = arith.negf %45 : vector<8x96xf32>
    %47 = math.exp %46 : vector<8x96xf32>
    %cst_23 = arith.constant 1.000000e+00 : f32
    %48 = vector.broadcast %cst_23 : f32 to vector<8x96xf32>
    %49 = arith.addf %48, %47 : vector<8x96xf32>
    %50 = arith.divf %48, %49 : vector<8x96xf32>
    %51 = vector.extract_strided_slice %44 {offsets = [0, 96], sizes = [8, 32], strides = [1, 1]} : vector<8x128xf32> to vector<8x32xf32>
    %52 = math.tanh %51 : vector<8x32xf32>
    %53 = vector.extract_strided_slice %50 {offsets = [0, 0], sizes = [8, 32], strides = [1, 1]} : vector<8x96xf32> to vector<8x32xf32>
    %54 = vector.extract_strided_slice %50 {offsets = [0, 32], sizes = [8, 32], strides = [1, 1]} : vector<8x96xf32> to vector<8x32xf32>
    %55 = vector.extract_strided_slice %50 {offsets = [0, 64], sizes = [8, 32], strides = [1, 1]} : vector<8x96xf32> to vector<8x32xf32>
    %c0_24 = arith.constant 0 : index
    %c0_25 = arith.constant 0 : index
    %56 = vector.load %arg6[%c0_24, %c0_25] : memref<8x32xf32, #tpu.memory_space<vmem>>, vector<8x32xf32>
    %57 = arith.mulf %54, %56 : vector<8x32xf32>
    %58 = arith.mulf %53, %52 : vector<8x32xf32>
    %59 = arith.addf %57, %58 : vector<8x32xf32>
    %60 = math.tanh %59 : vector<8x32xf32>
    %61 = arith.mulf %55, %60 : vector<8x32xf32>
    %c0_26 = arith.constant 0 : index
    %c0_27 = arith.constant 0 : index
    %62 = vector.load %arg6[%c0_26, %c0_27] : memref<8x32xf32, #tpu.memory_space<vmem>>, vector<8x32xf32>
    tpu.vector_store %arg6[%c0_26, %c0_27], %59 {strides = array<i32>} : memref<8x32xf32, #tpu.memory_space<vmem>>, vector<8x32xf32>,
    %c0_28 = arith.constant 0 : index
    %c0_29 = arith.constant 0 : index
    %63 = vector.load %arg5[%c0_28, %c0_29] : memref<8x32xf32, #tpu.memory_space<vmem>>, vector<8x32xf32>
    tpu.vector_store %arg5[%c0_28, %c0_29], %61 {strides = array<i32>} : memref<8x32xf32, #tpu.memory_space<vmem>>, vector<8x32xf32>,
    %64 = arith.truncf %61 : vector<8x32xf32> to vector<8x32xbf16>
    %65 = arith.index_cast %c1_i32 : i32 to index
    %c0_30 = arith.constant 0 : index
    %c0_31 = arith.constant 0 : index
    %66 = vector.load %arg4[%65, %c0_30, %c0_31] : memref<8x8x32xbf16, #tpu.memory_space<vmem>>, vector<1x8x32xbf16>
    %67 = vector.shape_cast %66 : vector<1x8x32xbf16> to vector<8x32xbf16>
    %68 = vector.shape_cast %64 : vector<8x32xbf16> to vector<1x8x32xbf16>
    tpu.vector_store %arg4[%65, %c0_30, %c0_31], %68 {strides = array<i32>} : memref<8x8x32xbf16, #tpu.memory_space<vmem>>, vector<1x8x32xbf16>,
    %c2_i32 = arith.constant 2 : i32
    %c0_32 = arith.constant 0 : index
    %c0_33 = arith.constant 0 : index
    %69 = vector.load %arg3[%c0_32, %c0_33] : memref<32x128xbf16, #tpu.memory_space<vmem>>, vector<32x128xbf16>
    %70 = arith.index_cast %c2_i32 : i32 to index
    %c0_34 = arith.constant 0 : index
    %c0_35 = arith.constant 0 : index
    %71 = vector.load %arg2[%70, %c0_34, %c0_35] : memref<8x8x128xbf16, #tpu.memory_space<vmem>>, vector<1x8x128xbf16>
    %72 = vector.shape_cast %71 : vector<1x8x128xbf16> to vector<8x128xbf16>
    %73 = arith.extf %72 : vector<8x128xbf16> to vector<8x128xf32>
    %c0_36 = arith.constant 0 : index
    %c0_37 = arith.constant 0 : index
    %74 = vector.load %arg5[%c0_36, %c0_37] : memref<8x32xf32, #tpu.memory_space<vmem>>, vector<8x32xf32>
    %75 = arith.truncf %74 : vector<8x32xf32> to vector<8x32xbf16>
    %cst_38 = arith.constant dense<0.000000e+00> : vector<8x128xf32>
    %76 = tpu.matmul %75, %69, %cst_38 {dimension_numbers = #tpu.dot_dimension_numbers<[1], [0], [0], [1], [0, 0, 1, 1], [], []>} : vector<8x32xbf16>, vector<32x128xbf16>, vector<8x128xf32> -> vector<8x128xf32>
    %77 = arith.addf %73, %76 : vector<8x128xf32>
    %78 = vector.extract_strided_slice %77 {offsets = [0, 0], sizes = [8, 96], strides = [1, 1]} : vector<8x128xf32> to vector<8x96xf32>
    %79 = arith.negf %78 : vector<8x96xf32>
    %80 = math.exp %79 : vector<8x96xf32>
    %cst_39 = arith.constant 1.000000e+00 : f32
    %81 = vector.broadcast %cst_39 : f32 to vector<8x96xf32>
    %82 = arith.addf %81, %80 : vector<8x96xf32>
    %83 = arith.divf %81, %82 : vector<8x96xf32>
    %84 = vector.extract_strided_slice %77 {offsets = [0, 96], sizes = [8, 32], strides = [1, 1]} : vector<8x128xf32> to vector<8x32xf32>
    %85 = math.tanh %84 : vector<8x32xf32>
    %86 = vector.extract_strided_slice %83 {offsets = [0, 0], sizes = [8, 32], strides = [1, 1]} : vector<8x96xf32> to vector<8x32xf32>
    %87 = vector.extract_strided_slice %83 {offsets = [0, 32], sizes = [8, 32], strides = [1, 1]} : vector<8x96xf32> to vector<8x32xf32>
    %88 = vector.extract_strided_slice %83 {offsets = [0, 64], sizes = [8, 32], strides = [1, 1]} : vector<8x96xf32> to vector<8x32xf32>
    %c0_40 = arith.constant 0 : index
    %c0_41 = arith.constant 0 : index
    %89 = vector.load %arg6[%c0_40, %c0_41] : memref<8x32xf32, #tpu.memory_space<vmem>>, vector<8x32xf32>
    %90 = arith.mulf %87, %89 : vector<8x32xf32>
    %91 = arith.mulf %86, %85 : vector<8x32xf32>
    %92 = arith.addf %90, %91 : vector<8x32xf32>
    %93 = math.tanh %92 : vector<8x32xf32>
    %94 = arith.mulf %88, %93 : vector<8x32xf32>
    %c0_42 = arith.constant 0 : index
    %c0_43 = arith.constant 0 : index
    %95 = vector.load %arg6[%c0_42, %c0_43] : memref<8x32xf32, #tpu.memory_space<vmem>>, vector<8x32xf32>
    tpu.vector_store %arg6[%c0_42, %c0_43], %92 {strides = array<i32>} : memref<8x32xf32, #tpu.memory_space<vmem>>, vector<8x32xf32>,
    %c0_44 = arith.constant 0 : index
    %c0_45 = arith.constant 0 : index
    %96 = vector.load %arg5[%c0_44, %c0_45] : memref<8x32xf32, #tpu.memory_space<vmem>>, vector<8x32xf32>
    tpu.vector_store %arg5[%c0_44, %c0_45], %94 {strides = array<i32>} : memref<8x32xf32, #tpu.memory_space<vmem>>, vector<8x32xf32>,
    %97 = arith.truncf %94 : vector<8x32xf32> to vector<8x32xbf16>
    %98 = arith.index_cast %c2_i32 : i32 to index
    %c0_46 = arith.constant 0 : index
    %c0_47 = arith.constant 0 : index
    %99 = vector.load %arg4[%98, %c0_46, %c0_47] : memref<8x8x32xbf16, #tpu.memory_space<vmem>>, vector<1x8x32xbf16>
    %100 = vector.shape_cast %99 : vector<1x8x32xbf16> to vector<8x32xbf16>
    %101 = vector.shape_cast %97 : vector<8x32xbf16> to vector<1x8x32xbf16>
    tpu.vector_store %arg4[%98, %c0_46, %c0_47], %101 {strides = array<i32>} : memref<8x8x32xbf16, #tpu.memory_space<vmem>>, vector<1x8x32xbf16>,
    %c3_i32 = arith.constant 3 : i32
    %c0_48 = arith.constant 0 : index
    %c0_49 = arith.constant 0 : index
    %102 = vector.load %arg3[%c0_48, %c0_49] : memref<32x128xbf16, #tpu.memory_space<vmem>>, vector<32x128xbf16>
    %103 = arith.index_cast %c3_i32 : i32 to index
    %c0_50 = arith.constant 0 : index
    %c0_51 = arith.constant 0 : index
    %104 = vector.load %arg2[%103, %c0_50, %c0_51] : memref<8x8x128xbf16, #tpu.memory_space<vmem>>, vector<1x8x128xbf16>
    %105 = vector.shape_cast %104 : vector<1x8x128xbf16> to vector<8x128xbf16>
    %106 = arith.extf %105 : vector<8x128xbf16> to vector<8x128xf32>
    %c0_52 = arith.constant 0 : index
    %c0_53 = arith.constant 0 : index
    %107 = vector.load %arg5[%c0_52, %c0_53] : memref<8x32xf32, #tpu.memory_space<vmem>>, vector<8x32xf32>
    %108 = arith.truncf %107 : vector<8x32xf32> to vector<8x32xbf16>
    %cst_54 = arith.constant dense<0.000000e+00> : vector<8x128xf32>
    %109 = tpu.matmul %108, %102, %cst_54 {dimension_numbers = #tpu.dot_dimension_numbers<[1], [0], [0], [1], [0, 0, 1, 1], [], []>} : vector<8x32xbf16>, vector<32x128xbf16>, vector<8x128xf32> -> vector<8x128xf32>
    %110 = arith.addf %106, %109 : vector<8x128xf32>
    %111 = vector.extract_strided_slice %110 {offsets = [0, 0], sizes = [8, 96], strides = [1, 1]} : vector<8x128xf32> to vector<8x96xf32>
    %112 = arith.negf %111 : vector<8x96xf32>
    %113 = math.exp %112 : vector<8x96xf32>
    %cst_55 = arith.constant 1.000000e+00 : f32
    %114 = vector.broadcast %cst_55 : f32 to vector<8x96xf32>
    %115 = arith.addf %114, %113 : vector<8x96xf32>
    %116 = arith.divf %114, %115 : vector<8x96xf32>
    %117 = vector.extract_strided_slice %110 {offsets = [0, 96], sizes = [8, 32], strides = [1, 1]} : vector<8x128xf32> to vector<8x32xf32>
    %118 = math.tanh %117 : vector<8x32xf32>
    %119 = vector.extract_strided_slice %116 {offsets = [0, 0], sizes = [8, 32], strides = [1, 1]} : vector<8x96xf32> to vector<8x32xf32>
    %120 = vector.extract_strided_slice %116 {offsets = [0, 32], sizes = [8, 32], strides = [1, 1]} : vector<8x96xf32> to vector<8x32xf32>
    %121 = vector.extract_strided_slice %116 {offsets = [0, 64], sizes = [8, 32], strides = [1, 1]} : vector<8x96xf32> to vector<8x32xf32>
    %c0_56 = arith.constant 0 : index
    %c0_57 = arith.constant 0 : index
    %122 = vector.load %arg6[%c0_56, %c0_57] : memref<8x32xf32, #tpu.memory_space<vmem>>, vector<8x32xf32>
    %123 = arith.mulf %120, %122 : vector<8x32xf32>
    %124 = arith.mulf %119, %118 : vector<8x32xf32>
    %125 = arith.addf %123, %124 : vector<8x32xf32>
    %126 = math.tanh %125 : vector<8x32xf32>
    %127 = arith.mulf %121, %126 : vector<8x32xf32>
    %c0_58 = arith.constant 0 : index
    %c0_59 = arith.constant 0 : index
    %128 = vector.load %arg6[%c0_58, %c0_59] : memref<8x32xf32, #tpu.memory_space<vmem>>, vector<8x32xf32>
    tpu.vector_store %arg6[%c0_58, %c0_59], %125 {strides = array<i32>} : memref<8x32xf32, #tpu.memory_space<vmem>>, vector<8x32xf32>,
    %c0_60 = arith.constant 0 : index
    %c0_61 = arith.constant 0 : index
    %129 = vector.load %arg5[%c0_60, %c0_61] : memref<8x32xf32, #tpu.memory_space<vmem>>, vector<8x32xf32>
    tpu.vector_store %arg5[%c0_60, %c0_61], %127 {strides = array<i32>} : memref<8x32xf32, #tpu.memory_space<vmem>>, vector<8x32xf32>,
    %130 = arith.truncf %127 : vector<8x32xf32> to vector<8x32xbf16>
    %131 = arith.index_cast %c3_i32 : i32 to index
    %c0_62 = arith.constant 0 : index
    %c0_63 = arith.constant 0 : index
    %132 = vector.load %arg4[%131, %c0_62, %c0_63] : memref<8x8x32xbf16, #tpu.memory_space<vmem>>, vector<1x8x32xbf16>
    %133 = vector.shape_cast %132 : vector<1x8x32xbf16> to vector<8x32xbf16>
    %134 = vector.shape_cast %130 : vector<8x32xbf16> to vector<1x8x32xbf16>
    tpu.vector_store %arg4[%131, %c0_62, %c0_63], %134 {strides = array<i32>} : memref<8x8x32xbf16, #tpu.memory_space<vmem>>, vector<1x8x32xbf16>,
    %c4_i32 = arith.constant 4 : i32
    %c0_64 = arith.constant 0 : index
    %c0_65 = arith.constant 0 : index
    %135 = vector.load %arg3[%c0_64, %c0_65] : memref<32x128xbf16, #tpu.memory_space<vmem>>, vector<32x128xbf16>
    %136 = arith.index_cast %c4_i32 : i32 to index
    %c0_66 = arith.constant 0 : index
    %c0_67 = arith.constant 0 : index
    %137 = vector.load %arg2[%136, %c0_66, %c0_67] : memref<8x8x128xbf16, #tpu.memory_space<vmem>>, vector<1x8x128xbf16>
    %138 = vector.shape_cast %137 : vector<1x8x128xbf16> to vector<8x128xbf16>
    %139 = arith.extf %138 : vector<8x128xbf16> to vector<8x128xf32>
    %c0_68 = arith.constant 0 : index
    %c0_69 = arith.constant 0 : index
    %140 = vector.load %arg5[%c0_68, %c0_69] : memref<8x32xf32, #tpu.memory_space<vmem>>, vector<8x32xf32>
    %141 = arith.truncf %140 : vector<8x32xf32> to vector<8x32xbf16>
    %cst_70 = arith.constant dense<0.000000e+00> : vector<8x128xf32>
    %142 = tpu.matmul %141, %135, %cst_70 {dimension_numbers = #tpu.dot_dimension_numbers<[1], [0], [0], [1], [0, 0, 1, 1], [], []>} : vector<8x32xbf16>, vector<32x128xbf16>, vector<8x128xf32> -> vector<8x128xf32>
    %143 = arith.addf %139, %142 : vector<8x128xf32>
    %144 = vector.extract_strided_slice %143 {offsets = [0, 0], sizes = [8, 96], strides = [1, 1]} : vector<8x128xf32> to vector<8x96xf32>
    %145 = arith.negf %144 : vector<8x96xf32>
    %146 = math.exp %145 : vector<8x96xf32>
    %cst_71 = arith.constant 1.000000e+00 : f32
    %147 = vector.broadcast %cst_71 : f32 to vector<8x96xf32>
    %148 = arith.addf %147, %146 : vector<8x96xf32>
    %149 = arith.divf %147, %148 : vector<8x96xf32>
    %150 = vector.extract_strided_slice %143 {offsets = [0, 96], sizes = [8, 32], strides = [1, 1]} : vector<8x128xf32> to vector<8x32xf32>
    %151 = math.tanh %150 : vector<8x32xf32>
    %152 = vector.extract_strided_slice %149 {offsets = [0, 0], sizes = [8, 32], strides = [1, 1]} : vector<8x96xf32> to vector<8x32xf32>
    %153 = vector.extract_strided_slice %149 {offsets = [0, 32], sizes = [8, 32], strides = [1, 1]} : vector<8x96xf32> to vector<8x32xf32>
    %154 = vector.extract_strided_slice %149 {offsets = [0, 64], sizes = [8, 32], strides = [1, 1]} : vector<8x96xf32> to vector<8x32xf32>
    %c0_72 = arith.constant 0 : index
    %c0_73 = arith.constant 0 : index
    %155 = vector.load %arg6[%c0_72, %c0_73] : memref<8x32xf32, #tpu.memory_space<vmem>>, vector<8x32xf32>
    %156 = arith.mulf %153, %155 : vector<8x32xf32>
    %157 = arith.mulf %152, %151 : vector<8x32xf32>
    %158 = arith.addf %156, %157 : vector<8x32xf32>
    %159 = math.tanh %158 : vector<8x32xf32>
    %160 = arith.mulf %154, %159 : vector<8x32xf32>
    %c0_74 = arith.constant 0 : index
    %c0_75 = arith.constant 0 : index
    %161 = vector.load %arg6[%c0_74, %c0_75] : memref<8x32xf32, #tpu.memory_space<vmem>>, vector<8x32xf32>
    tpu.vector_store %arg6[%c0_74, %c0_75], %158 {strides = array<i32>} : memref<8x32xf32, #tpu.memory_space<vmem>>, vector<8x32xf32>,
    %c0_76 = arith.constant 0 : index
    %c0_77 = arith.constant 0 : index
    %162 = vector.load %arg5[%c0_76, %c0_77] : memref<8x32xf32, #tpu.memory_space<vmem>>, vector<8x32xf32>
    tpu.vector_store %arg5[%c0_76, %c0_77], %160 {strides = array<i32>} : memref<8x32xf32, #tpu.memory_space<vmem>>, vector<8x32xf32>,
    %163 = arith.truncf %160 : vector<8x32xf32> to vector<8x32xbf16>
    %164 = arith.index_cast %c4_i32 : i32 to index
    %c0_78 = arith.constant 0 : index
    %c0_79 = arith.constant 0 : index
    %165 = vector.load %arg4[%164, %c0_78, %c0_79] : memref<8x8x32xbf16, #tpu.memory_space<vmem>>, vector<1x8x32xbf16>
    %166 = vector.shape_cast %165 : vector<1x8x32xbf16> to vector<8x32xbf16>
    %167 = vector.shape_cast %163 : vector<8x32xbf16> to vector<1x8x32xbf16>
    tpu.vector_store %arg4[%164, %c0_78, %c0_79], %167 {strides = array<i32>} : memref<8x8x32xbf16, #tpu.memory_space<vmem>>, vector<1x8x32xbf16>,
    %c5_i32 = arith.constant 5 : i32
    %c0_80 = arith.constant 0 : index
    %c0_81 = arith.constant 0 : index
    %168 = vector.load %arg3[%c0_80, %c0_81] : memref<32x128xbf16, #tpu.memory_space<vmem>>, vector<32x128xbf16>
    %169 = arith.index_cast %c5_i32 : i32 to index
    %c0_82 = arith.constant 0 : index
    %c0_83 = arith.constant 0 : index
    %170 = vector.load %arg2[%169, %c0_82, %c0_83] : memref<8x8x128xbf16, #tpu.memory_space<vmem>>, vector<1x8x128xbf16>
    %171 = vector.shape_cast %170 : vector<1x8x128xbf16> to vector<8x128xbf16>
    %172 = arith.extf %171 : vector<8x128xbf16> to vector<8x128xf32>
    %c0_84 = arith.constant 0 : index
    %c0_85 = arith.constant 0 : index
    %173 = vector.load %arg5[%c0_84, %c0_85] : memref<8x32xf32, #tpu.memory_space<vmem>>, vector<8x32xf32>
    %174 = arith.truncf %173 : vector<8x32xf32> to vector<8x32xbf16>
    %cst_86 = arith.constant dense<0.000000e+00> : vector<8x128xf32>
    %175 = tpu.matmul %174, %168, %cst_86 {dimension_numbers = #tpu.dot_dimension_numbers<[1], [0], [0], [1], [0, 0, 1, 1], [], []>} : vector<8x32xbf16>, vector<32x128xbf16>, vector<8x128xf32> -> vector<8x128xf32>
    %176 = arith.addf %172, %175 : vector<8x128xf32>
    %177 = vector.extract_strided_slice %176 {offsets = [0, 0], sizes = [8, 96], strides = [1, 1]} : vector<8x128xf32> to vector<8x96xf32>
    %178 = arith.negf %177 : vector<8x96xf32>
    %179 = math.exp %178 : vector<8x96xf32>
    %cst_87 = arith.constant 1.000000e+00 : f32
    %180 = vector.broadcast %cst_87 : f32 to vector<8x96xf32>
    %181 = arith.addf %180, %179 : vector<8x96xf32>
    %182 = arith.divf %180, %181 : vector<8x96xf32>
    %183 = vector.extract_strided_slice %176 {offsets = [0, 96], sizes = [8, 32], strides = [1, 1]} : vector<8x128xf32> to vector<8x32xf32>
    %184 = math.tanh %183 : vector<8x32xf32>
    %185 = vector.extract_strided_slice %182 {offsets = [0, 0], sizes = [8, 32], strides = [1, 1]} : vector<8x96xf32> to vector<8x32xf32>
    %186 = vector.extract_strided_slice %182 {offsets = [0, 32], sizes = [8, 32], strides = [1, 1]} : vector<8x96xf32> to vector<8x32xf32>
    %187 = vector.extract_strided_slice %182 {offsets = [0, 64], sizes = [8, 32], strides = [1, 1]} : vector<8x96xf32> to vector<8x32xf32>
    %c0_88 = arith.constant 0 : index
    %c0_89 = arith.constant 0 : index
    %188 = vector.load %arg6[%c0_88, %c0_89] : memref<8x32xf32, #tpu.memory_space<vmem>>, vector<8x32xf32>
    %189 = arith.mulf %186, %188 : vector<8x32xf32>
    %190 = arith.mulf %185, %184 : vector<8x32xf32>
    %191 = arith.addf %189, %190 : vector<8x32xf32>
    %192 = math.tanh %191 : vector<8x32xf32>
    %193 = arith.mulf %187, %192 : vector<8x32xf32>
    %c0_90 = arith.constant 0 : index
    %c0_91 = arith.constant 0 : index
    %194 = vector.load %arg6[%c0_90, %c0_91] : memref<8x32xf32, #tpu.memory_space<vmem>>, vector<8x32xf32>
    tpu.vector_store %arg6[%c0_90, %c0_91], %191 {strides = array<i32>} : memref<8x32xf32, #tpu.memory_space<vmem>>, vector<8x32xf32>,
    %c0_92 = arith.constant 0 : index
    %c0_93 = arith.constant 0 : index
    %195 = vector.load %arg5[%c0_92, %c0_93] : memref<8x32xf32, #tpu.memory_space<vmem>>, vector<8x32xf32>
    tpu.vector_store %arg5[%c0_92, %c0_93], %193 {strides = array<i32>} : memref<8x32xf32, #tpu.memory_space<vmem>>, vector<8x32xf32>,
    %196 = arith.truncf %193 : vector<8x32xf32> to vector<8x32xbf16>
    %197 = arith.index_cast %c5_i32 : i32 to index
    %c0_94 = arith.constant 0 : index
    %c0_95 = arith.constant 0 : index
    %198 = vector.load %arg4[%197, %c0_94, %c0_95] : memref<8x8x32xbf16, #tpu.memory_space<vmem>>, vector<1x8x32xbf16>
    %199 = vector.shape_cast %198 : vector<1x8x32xbf16> to vector<8x32xbf16>
    %200 = vector.shape_cast %196 : vector<8x32xbf16> to vector<1x8x32xbf16>
    tpu.vector_store %arg4[%197, %c0_94, %c0_95], %200 {strides = array<i32>} : memref<8x8x32xbf16, #tpu.memory_space<vmem>>, vector<1x8x32xbf16>,
    %c6_i32 = arith.constant 6 : i32
    %c0_96 = arith.constant 0 : index
    %c0_97 = arith.constant 0 : index
    %201 = vector.load %arg3[%c0_96, %c0_97] : memref<32x128xbf16, #tpu.memory_space<vmem>>, vector<32x128xbf16>
    %202 = arith.index_cast %c6_i32 : i32 to index
    %c0_98 = arith.constant 0 : index
    %c0_99 = arith.constant 0 : index
    %203 = vector.load %arg2[%202, %c0_98, %c0_99] : memref<8x8x128xbf16, #tpu.memory_space<vmem>>, vector<1x8x128xbf16>
    %204 = vector.shape_cast %203 : vector<1x8x128xbf16> to vector<8x128xbf16>
    %205 = arith.extf %204 : vector<8x128xbf16> to vector<8x128xf32>
    %c0_100 = arith.constant 0 : index
    %c0_101 = arith.constant 0 : index
    %206 = vector.load %arg5[%c0_100, %c0_101] : memref<8x32xf32, #tpu.memory_space<vmem>>, vector<8x32xf32>
    %207 = arith.truncf %206 : vector<8x32xf32> to vector<8x32xbf16>
    %cst_102 = arith.constant dense<0.000000e+00> : vector<8x128xf32>
    %208 = tpu.matmul %207, %201, %cst_102 {dimension_numbers = #tpu.dot_dimension_numbers<[1], [0], [0], [1], [0, 0, 1, 1], [], []>} : vector<8x32xbf16>, vector<32x128xbf16>, vector<8x128xf32> -> vector<8x128xf32>
    %209 = arith.addf %205, %208 : vector<8x128xf32>
    %210 = vector.extract_strided_slice %209 {offsets = [0, 0], sizes = [8, 96], strides = [1, 1]} : vector<8x128xf32> to vector<8x96xf32>
    %211 = arith.negf %210 : vector<8x96xf32>
    %212 = math.exp %211 : vector<8x96xf32>
    %cst_103 = arith.constant 1.000000e+00 : f32
    %213 = vector.broadcast %cst_103 : f32 to vector<8x96xf32>
    %214 = arith.addf %213, %212 : vector<8x96xf32>
    %215 = arith.divf %213, %214 : vector<8x96xf32>
    %216 = vector.extract_strided_slice %209 {offsets = [0, 96], sizes = [8, 32], strides = [1, 1]} : vector<8x128xf32> to vector<8x32xf32>
    %217 = math.tanh %216 : vector<8x32xf32>
    %218 = vector.extract_strided_slice %215 {offsets = [0, 0], sizes = [8, 32], strides = [1, 1]} : vector<8x96xf32> to vector<8x32xf32>
    %219 = vector.extract_strided_slice %215 {offsets = [0, 32], sizes = [8, 32], strides = [1, 1]} : vector<8x96xf32> to vector<8x32xf32>
    %220 = vector.extract_strided_slice %215 {offsets = [0, 64], sizes = [8, 32], strides = [1, 1]} : vector<8x96xf32> to vector<8x32xf32>
    %c0_104 = arith.constant 0 : index
    %c0_105 = arith.constant 0 : index
    %221 = vector.load %arg6[%c0_104, %c0_105] : memref<8x32xf32, #tpu.memory_space<vmem>>, vector<8x32xf32>
    %222 = arith.mulf %219, %221 : vector<8x32xf32>
    %223 = arith.mulf %218, %217 : vector<8x32xf32>
    %224 = arith.addf %222, %223 : vector<8x32xf32>
    %225 = math.tanh %224 : vector<8x32xf32>
    %226 = arith.mulf %220, %225 : vector<8x32xf32>
    %c0_106 = arith.constant 0 : index
    %c0_107 = arith.constant 0 : index
    %227 = vector.load %arg6[%c0_106, %c0_107] : memref<8x32xf32, #tpu.memory_space<vmem>>, vector<8x32xf32>
    tpu.vector_store %arg6[%c0_106, %c0_107], %224 {strides = array<i32>} : memref<8x32xf32, #tpu.memory_space<vmem>>, vector<8x32xf32>,
    %c0_108 = arith.constant 0 : index
    %c0_109 = arith.constant 0 : index
    %228 = vector.load %arg5[%c0_108, %c0_109] : memref<8x32xf32, #tpu.memory_space<vmem>>, vector<8x32xf32>
    tpu.vector_store %arg5[%c0_108, %c0_109], %226 {strides = array<i32>} : memref<8x32xf32, #tpu.memory_space<vmem>>, vector<8x32xf32>,
    %229 = arith.truncf %226 : vector<8x32xf32> to vector<8x32xbf16>
    %230 = arith.index_cast %c6_i32 : i32 to index
    %c0_110 = arith.constant 0 : index
    %c0_111 = arith.constant 0 : index
    %231 = vector.load %arg4[%230, %c0_110, %c0_111] : memref<8x8x32xbf16, #tpu.memory_space<vmem>>, vector<1x8x32xbf16>
    %232 = vector.shape_cast %231 : vector<1x8x32xbf16> to vector<8x32xbf16>
    %233 = vector.shape_cast %229 : vector<8x32xbf16> to vector<1x8x32xbf16>
    tpu.vector_store %arg4[%230, %c0_110, %c0_111], %233 {strides = array<i32>} : memref<8x8x32xbf16, #tpu.memory_space<vmem>>, vector<1x8x32xbf16>,
    %c7_i32 = arith.constant 7 : i32
    %c0_112 = arith.constant 0 : index
    %c0_113 = arith.constant 0 : index
    %234 = vector.load %arg3[%c0_112, %c0_113] : memref<32x128xbf16, #tpu.memory_space<vmem>>, vector<32x128xbf16>
    %235 = arith.index_cast %c7_i32 : i32 to index
    %c0_114 = arith.constant 0 : index
    %c0_115 = arith.constant 0 : index
    %236 = vector.load %arg2[%235, %c0_114, %c0_115] : memref<8x8x128xbf16, #tpu.memory_space<vmem>>, vector<1x8x128xbf16>
    %237 = vector.shape_cast %236 : vector<1x8x128xbf16> to vector<8x128xbf16>
    %238 = arith.extf %237 : vector<8x128xbf16> to vector<8x128xf32>
    %c0_116 = arith.constant 0 : index
    %c0_117 = arith.constant 0 : index
    %239 = vector.load %arg5[%c0_116, %c0_117] : memref<8x32xf32, #tpu.memory_space<vmem>>, vector<8x32xf32>
    %240 = arith.truncf %239 : vector<8x32xf32> to vector<8x32xbf16>
    %cst_118 = arith.constant dense<0.000000e+00> : vector<8x128xf32>
    %241 = tpu.matmul %240, %234, %cst_118 {dimension_numbers = #tpu.dot_dimension_numbers<[1], [0], [0], [1], [0, 0, 1, 1], [], []>} : vector<8x32xbf16>, vector<32x128xbf16>, vector<8x128xf32> -> vector<8x128xf32>
    %242 = arith.addf %238, %241 : vector<8x128xf32>
    %243 = vector.extract_strided_slice %242 {offsets = [0, 0], sizes = [8, 96], strides = [1, 1]} : vector<8x128xf32> to vector<8x96xf32>
    %244 = arith.negf %243 : vector<8x96xf32>
    %245 = math.exp %244 : vector<8x96xf32>
    %cst_119 = arith.constant 1.000000e+00 : f32
    %246 = vector.broadcast %cst_119 : f32 to vector<8x96xf32>
    %247 = arith.addf %246, %245 : vector<8x96xf32>
    %248 = arith.divf %246, %247 : vector<8x96xf32>
    %249 = vector.extract_strided_slice %242 {offsets = [0, 96], sizes = [8, 32], strides = [1, 1]} : vector<8x128xf32> to vector<8x32xf32>
    %250 = math.tanh %249 : vector<8x32xf32>
    %251 = vector.extract_strided_slice %248 {offsets = [0, 0], sizes = [8, 32], strides = [1, 1]} : vector<8x96xf32> to vector<8x32xf32>
    %252 = vector.extract_strided_slice %248 {offsets = [0, 32], sizes = [8, 32], strides = [1, 1]} : vector<8x96xf32> to vector<8x32xf32>
    %253 = vector.extract_strided_slice %248 {offsets = [0, 64], sizes = [8, 32], strides = [1, 1]} : vector<8x96xf32> to vector<8x32xf32>
    %c0_120 = arith.constant 0 : index
    %c0_121 = arith.constant 0 : index
    %254 = vector.load %arg6[%c0_120, %c0_121] : memref<8x32xf32, #tpu.memory_space<vmem>>, vector<8x32xf32>
    %255 = arith.mulf %252, %254 : vector<8x32xf32>
    %256 = arith.mulf %251, %250 : vector<8x32xf32>
    %257 = arith.addf %255, %256 : vector<8x32xf32>
    %258 = math.tanh %257 : vector<8x32xf32>
    %259 = arith.mulf %253, %258 : vector<8x32xf32>
    %c0_122 = arith.constant 0 : index
    %c0_123 = arith.constant 0 : index
    %260 = vector.load %arg6[%c0_122, %c0_123] : memref<8x32xf32, #tpu.memory_space<vmem>>, vector<8x32xf32>
    tpu.vector_store %arg6[%c0_122, %c0_123], %257 {strides = array<i32>} : memref<8x32xf32, #tpu.memory_space<vmem>>, vector<8x32xf32>,
    %c0_124 = arith.constant 0 : index
    %c0_125 = arith.constant 0 : index
    %261 = vector.load %arg5[%c0_124, %c0_125] : memref<8x32xf32, #tpu.memory_space<vmem>>, vector<8x32xf32>
    tpu.vector_store %arg5[%c0_124, %c0_125], %259 {strides = array<i32>} : memref<8x32xf32, #tpu.memory_space<vmem>>, vector<8x32xf32>,
    %262 = arith.truncf %259 : vector<8x32xf32> to vector<8x32xbf16>
    %263 = arith.index_cast %c7_i32 : i32 to index
    %c0_126 = arith.constant 0 : index
    %c0_127 = arith.constant 0 : index
    %264 = vector.load %arg4[%263, %c0_126, %c0_127] : memref<8x8x32xbf16, #tpu.memory_space<vmem>>, vector<1x8x32xbf16>
    %265 = vector.shape_cast %264 : vector<1x8x32xbf16> to vector<8x32xbf16>
    %266 = vector.shape_cast %262 : vector<8x32xbf16> to vector<1x8x32xbf16>
    tpu.vector_store %arg4[%263, %c0_126, %c0_127], %266 {strides = array<i32>} : memref<8x8x32xbf16, #tpu.memory_space<vmem>>, vector<1x8x32xbf16>,
    %c8_i32 = arith.constant 8 : i32
    return
  }
  func.func @transform_0(%arg0: i32, %arg1: i32) -> (i32, i32, i32) {
    %c0_i32 = arith.constant 0 : i32
    %c0_i32_0 = arith.constant 0 : i32
    return %arg1, %arg0, %c0_i32 : i32, i32, i32
  }
  func.func @transform_1(%arg0: i32, %arg1: i32) -> (i32, i32) {
    %c0_i32 = arith.constant 0 : i32
    %c0_i32_0 = arith.constant 0 : i32
    %c0_i32_1 = arith.constant 0 : i32
    return %c0_i32, %c0_i32_0 : i32, i32
  }
  func.func @transform_2(%arg0: i32, %arg1: i32) -> (i32, i32, i32) {
    %c0_i32 = arith.constant 0 : i32
    %c0_i32_0 = arith.constant 0 : i32
    return %arg1, %arg0, %c0_i32 : i32, i32, i32
  }
}

</mosaic_0001>

<llo_original>
// kernel: tpu_custom_call.1
$region0: #{tpu_custom_call.1}
  #allocation0 [shape = 'u32[]', space=smem, size = 0x4, offset = 0x4, fixed_abs, tag = 'smem constant byte address 0x4 - core index']
  #allocation1 [shape = 'u32[144,128]{1,0:T(1,128)}', space=vmem, size = 0x12000, scoped, tag = 'internal scratch']
  #allocation2 [shape = 'f32[8,32]{1,0:T(8,128)}', space=vmem, size = 0x1000, scoped, tag = 'scratch operand']
  #allocation3 [shape = 'f32[8,32]{1,0:T(8,128)}', space=vmem, size = 0x1000, scoped, tag = 'scratch operand']
  %s0 = inlined_call_operand.hbm [shape: bf16[8,8,128], index: 0, kind: input, shape index: {}]
  %s1 = inlined_call_operand.hbm [shape: bf16[32,128], index: 1, kind: input, shape index: {}]
  %s2 = inlined_call_operand.hbm [shape: bf16[8,8,32], index: 2, kind: output, shape index: {}]
  %s3 = sld [smem:[#allocation0]]
  $region30: #{tpu_custom_call.1} parent=0
    _
  %s5 = ssub.s32 1, %s3
  %s6 = scalar_select 0, %s5, %s3
  $region1: #{tpu_custom_call.1} parent=0
    #allocation4 [shape = 'u8[16384]{0}', space=vmem, size = 0x4000, scoped, tag = 'input window, operand 0, single buffered']
    #allocation5 [shape = 's32[1]{0}', space=sflag, size = 0x4, scoped, tag = 'scoped memory for tpu_custom_call.1']
    #allocation6 [shape = 's32[1]{0}', space=sflag, size = 0x4, scoped, tag = 'scoped memory for tpu_custom_call.1']
    #allocation7 [shape = 'u8[8192]{0}', space=vmem, size = 0x2000, scoped, tag = 'input window, operand 1, single buffered']
    #allocation8 [shape = 's32[1]{0}', space=sflag, size = 0x4, scoped, tag = 'scoped memory for tpu_custom_call.1']
    #allocation9 [shape = 'u8[16384]{0}', space=vmem, size = 0x4000, scoped, tag = 'output window, operand 0, single buffered']
    %7 = vsyncpa [#allocation5], 0
    %8 = vsyncpa [#allocation8], 0
    %9 = vsyncpa [#allocation6], 0
    // Predicated region
    $region2: #{tpu_custom_call.1} parent=1 // pred_check
      _
    $region3: #{tpu_custom_call.1} parent=1 // pred_check_branch
      %11 = sbr.rel (0) target = $region5
    $region4: #{tpu_custom_call.1} parent=1 // pred_region
      %s13 = ssub.s32 512, 512
      %14 = vsyncadd [#allocation5], %s13
      %s15 = sshll.u32 [#allocation4], 4
      %s16 = int_to_ptr.vmem [resolvable:$true] %s15
      %21 = dma.hbm_to_vmem [thread:$0]  %s0, 512, %s16, [#allocation5], 64, 64, 4
    $region5: #{tpu_custom_call.1} parent=1 // pred_fallthru
      _
    // Predicated region
    $region6: #{tpu_custom_call.1} parent=1 // pred_check
      _
    $region7: #{tpu_custom_call.1} parent=1 // pred_check_branch
      %23 = sbr.rel (0) target = $region9
    $region8: #{tpu_custom_call.1} parent=1 // pred_region
      %s25 = ssub.s32 256, 256
      %26 = vsyncadd [#allocation8], %s25
      %s27 = sshll.u32 [#allocation7], 4
      %s28 = int_to_ptr.vmem [resolvable:$true] %s27
      %33 = dma.hbm_to_vmem [thread:$0]  %s1, 256, %s28, [#allocation8], 64, 64, 4
    $region9: #{tpu_custom_call.1} parent=1 // pred_fallthru
      _
    // Predicated region
    $region10: #{tpu_custom_call.1} parent=1 // pred_check
      _
    $region11: #{tpu_custom_call.1} parent=1 // pred_check_branch
      %35 = sbr.rel (0) target = $region13
    $region12: #{tpu_custom_call.1} parent=1 // pred_region
      %36 = dma.done [#allocation5], 512
    $region13: #{tpu_custom_call.1} parent=1 // pred_fallthru
      _
    // Predicated region
    $region14: #{tpu_custom_call.1} parent=1 // pred_check
      _
    $region15: #{tpu_custom_call.1} parent=1 // pred_check_branch
      %38 = sbr.rel (0) target = $region17
    $region16: #{tpu_custom_call.1} parent=1 // pred_region
      %39 = dma.done [#allocation8], 256
    $region17: #{tpu_custom_call.1} parent=1 // pred_fallthru
      _
    %p41 = scmp.eq.s32.totalorder 0, 0
    // Predicated region
    $region18: #{tpu_custom_call.1} parent=1 // pred_check
      %p42 = pneg %p41
    $region19: #{tpu_custom_call.1} parent=1 // pred_check_branch
      %44 = sbr.rel (%p42) target = $region21
    $region20: #{tpu_custom_call.1} parent=1 // pred_region
      %vm45 = vcmask 261120
      %46 = vst.msk [vmem:[#allocation2] sm:$0xff] %vm45, 0.0
      %47 = vst.msk [vmem:[#allocation3] sm:$0xff] %vm45, 0.0
    $region21: #{tpu_custom_call.1} parent=1 // pred_fallthru
      _
    %v48 = vld [vmem:[#allocation7] sm:$0xf]
    %v49 = vld [vmem:[#allocation7 + $0x4] sm:$0xf]
    %v50 = vld [vmem:[#allocation7 + $0x8] sm:$0xf]
    %v51 = vld [vmem:[#allocation7 + $0xc] sm:$0xf]
    %v52 = vld [vmem:[#allocation4] sm:$0xf]
    %v53 = vunpack.c.l.bf16 %v52
    %v54 = vld [vmem:[#allocation2] sm:$0xff]
    %v55 = vpack.c.bf16 %v54, %v54
    %v60 = vunpack.c.l.b16 %v48
    %v61 = vunpack.c.l.b16 %v49
    %v62 = vunpack.c.l.b16 %v50
    %v63 = vunpack.c.l.b16 %v51
    %v64 = vpack.c.b16 %v61, %v60
    %v65 = vpack.c.b16 %v63, %v62
    %vm68 = vcmask 261120
    %v70 = vsel %vm68, %v55, 0
    %72 = vmatprep.subr.bf16.mxu0 0
    %73 = vmatpush1.bf16.msra.mxu0 0
    %74 = vmatprep.subr.bf16.mxu0 0
    %75 = vmatpush1.bf16.msra.mxu0 0
    %76 = vmatprep.subr.bf16.mxu0 0
    %77 = vmatpush1.bf16.msra.mxu0 0
    %78 = vmatprep.subr.bf16.mxu0 0
    %79 = vmatpush1.bf16.msra.mxu0 0
    %80 = vmatprep.subr.bf16.mxu0 0
    %81 = vmatpush1.bf16.msra.mxu0 0
    %82 = vmatprep.subr.bf16.mxu0 0
    %83 = vmatpush1.bf16.msra.mxu0 0
    %84 = vmatprep.subr.bf16.mxu0 0
    %85 = vmatpush1.bf16.msra.mxu0 %v65
    %86 = vmatprep.subr.bf16.mxu0 0
    %87 = vmatpush1.bf16.msra.mxu0 %v64
    %88 = vmatprep.subr.bf16.mxu0 0
    %89 = vmatpush2.bf16.msra.mxu0 0
    %90 = vmatprep.subr.bf16.mxu0 0
    %91 = vmatpush2.bf16.msra.mxu0 0
    %92 = vmatprep.subr.bf16.mxu0 0
    %93 = vmatpush2.bf16.msra.mxu0 0
    %94 = vmatprep.subr.bf16.mxu0 0
    %95 = vmatpush2.bf16.msra.mxu0 0
    %96 = vmatprep.subr.bf16.mxu0 0
    %97 = vmatpush2.bf16.msra.mxu0 0
    %98 = vmatprep.subr.bf16.mxu0 0
    %99 = vmatpush2.bf16.msra.mxu0 0
    %100 = vmatprep.subr.bf16.mxu0 0
    %101 = vmatpush2.bf16.msra.mxu0 0
    %102 = vmatprep.subr.bf16.mxu0 0
    %103 = vmatpush2.bf16.msra.mxu0 0
    %104 = vmatprep.mubr.bf16.mxu0 0
    %105 = vmatmul.mubr.bf16.gmra.mxu0 %v70
    %v106 = vpop.f32.mrf.mxu0
    %v107 = vadd.f32 0.0, %v106
    %v108 = vpop.f32.mrf.mxu0
    %v109 = vpop.f32.mrf.mxu0
    %v110 = vpop.f32.mrf.mxu0
    %111 = vdwg.mxu0
    %v112 = vadd.f32 %v53, %v107
    %v113 = vxor.u32 %v112, 2147483648
    %v114 = vmul.f32 %v113, 1.442695
    %v115 = vpow.pop %v114
    %v116 = vadd.f32 %v115, 1.0
    %v117 = vrcp.pop %v116
    %v118 = vmul.f32 1.0, %v117
    %v119 = vtanh.pop %v112
    %v120 = vld [vmem:[#allocation3] sm:$0xff]
    %122 = vrot.lane.b32.xlu0 %v120, 32
    %v123 = vpop.permute.xlu0 %122
    %v125 = vmul.f32 %v118, %v123
    %127 = vrot.lane.b32.xlu0 %v119, 32
    %v128 = vpop.permute.xlu0 %127
    %v130 = vmul.f32 %v118, %v128
    %132 = vrot.lane.b32.xlu0 %v130, 32
    %v133 = vpop.permute.xlu0 %132
    %v135 = vadd.f32 %v125, %v133
    %v136 = vtanh.pop %v135
    %138 = vrot.lane.b32.xlu0 %v136, 32
    %v139 = vpop.permute.xlu0 %138
    %v141 = vmul.f32 %v118, %v139
    %143 = vrot.lane.b32.xlu0 %v135, 96
    %v144 = vpop.permute.xlu0 %143
    %146 = vst.msk [vmem:[#allocation3] sm:$0xff] %vm68, %v144
    %148 = vrot.lane.b32.xlu0 %v141, 64
    %v149 = vpop.permute.xlu0 %148
    %151 = vst.msk [vmem:[#allocation2] sm:$0xff] %vm68, %v149
    %v152 = vpack.c.bf16 %v141, %v141
    %v154 = vunpack.c.l.b16 %v152
    %v155 = vpack.c.b16 %v154, %v154
    %156 = vrot.lane.b32.xlu0 %v155, 64
    %v157 = vpop.permute.xlu0 %156
    %vm159 = vcmask 257024
    %160 = vst.msk [vmem:[#allocation9] sm:$0xf] %vm159, %v157
    %v161 = vld [vmem:[#allocation7] sm:$0xf]
    %v162 = vld [vmem:[#allocation7 + $0x4] sm:$0xf]
    %v163 = vld [vmem:[#allocation7 + $0x8] sm:$0xf]
    %v164 = vld [vmem:[#allocation7 + $0xc] sm:$0xf]
    %s165 = scalar_lea.vmem [#allocation4], 4
    %v166 = vld [vmem:[%s165] sm:$0xf]
    %v167 = vunpack.c.l.bf16 %v166
    %v168 = vld [vmem:[#allocation2] sm:$0xff]
    %v169 = vpack.c.bf16 %v168, %v168
    %v174 = vunpack.c.l.b16 %v161
    %v175 = vunpack.c.l.b16 %v162
    %v176 = vunpack.c.l.b16 %v163
    %v177 = vunpack.c.l.b16 %v164
    %v178 = vpack.c.b16 %v175, %v174
    %v179 = vpack.c.b16 %v177, %v176
    %v183 = vsel %vm68, %v169, 0
    %185 = vmatprep.subr.bf16.mxu0 0
    %186 = vmatpush1.bf16.msra.mxu0 0
    %187 = vmatprep.subr.bf16.mxu0 0
    %188 = vmatpush1.bf16.msra.mxu0 0
    %189 = vmatprep.subr.bf16.mxu0 0
    %190 = vmatpush1.bf16.msra.mxu0 0
    %191 = vmatprep.subr.bf16.mxu0 0
    %192 = vmatpush1.bf16.msra.mxu0 0
    %193 = vmatprep.subr.bf16.mxu0 0
    %194 = vmatpush1.bf16.msra.mxu0 0
    %195 = vmatprep.subr.bf16.mxu0 0
    %196 = vmatpush1.bf16.msra.mxu0 0
    %197 = vmatprep.subr.bf16.mxu0 0
    %198 = vmatpush1.bf16.msra.mxu0 %v179
    %199 = vmatprep.subr.bf16.mxu0 0
    %200 = vmatpush1.bf16.msra.mxu0 %v178
    %201 = vmatprep.subr.bf16.mxu0 0
    %202 = vmatpush2.bf16.msra.mxu0 0
    %203 = vmatprep.subr.bf16.mxu0 0
    %204 = vmatpush2.bf16.msra.mxu0 0
    %205 = vmatprep.subr.bf16.mxu0 0
    %206 = vmatpush2.bf16.msra.mxu0 0
    %207 = vmatprep.subr.bf16.mxu0 0
    %208 = vmatpush2.bf16.msra.mxu0 0
    %209 = vmatprep.subr.bf16.mxu0 0
    %210 = vmatpush2.bf16.msra.mxu0 0
    %211 = vmatprep.subr.bf16.mxu0 0
    %212 = vmatpush2.bf16.msra.mxu0 0
    %213 = vmatprep.subr.bf16.mxu0 0
    %214 = vmatpush2.bf16.msra.mxu0 0
    %215 = vmatprep.subr.bf16.mxu0 0
    %216 = vmatpush2.bf16.msra.mxu0 0
    %217 = vmatprep.mubr.bf16.mxu0 0
    %218 = vmatmul.mubr.bf16.gmra.mxu0 %v183
    %v219 = vpop.f32.mrf.mxu0
    %v220 = vadd.f32 0.0, %v219
    %v221 = vpop.f32.mrf.mxu0
    %v222 = vpop.f32.mrf.mxu0
    %v223 = vpop.f32.mrf.mxu0
    %224 = vdwg.mxu0
    %v225 = vadd.f32 %v167, %v220
    %v226 = vxor.u32 %v225, 2147483648
    %v227 = vmul.f32 %v226, 1.442695
    %v228 = vpow.pop %v227
    %v229 = vadd.f32 %v228, 1.0
    %v230 = vrcp.pop %v229
    %v231 = vmul.f32 1.0, %v230
    %v232 = vtanh.pop %v225
    %v233 = vld [vmem:[#allocation3] sm:$0xff]
    %235 = vrot.lane.b32.xlu0 %v233, 32
    %v236 = vpop.permute.xlu0 %235
    %v238 = vmul.f32 %v231, %v236
    %240 = vrot.lane.b32.xlu0 %v232, 32
    %v241 = vpop.permute.xlu0 %240
    %v243 = vmul.f32 %v231, %v241
    %245 = vrot.lane.b32.xlu0 %v243, 32
    %v246 = vpop.permute.xlu0 %245
    %v248 = vadd.f32 %v238, %v246
    %v249 = vtanh.pop %v248
    %251 = vrot.lane.b32.xlu0 %v249, 32
    %v252 = vpop.permute.xlu0 %251
    %v254 = vmul.f32 %v231, %v252
    %256 = vrot.lane.b32.xlu0 %v248, 96
    %v257 = vpop.permute.xlu0 %256
    %259 = vst.msk [vmem:[#allocation3] sm:$0xff] %vm68, %v257
    %261 = vrot.lane.b32.xlu0 %v254, 64
    %v262 = vpop.permute.xlu0 %261
    %264 = vst.msk [vmem:[#allocation2] sm:$0xff] %vm68, %v262
    %v265 = vpack.c.bf16 %v254, %v254
    %v267 = vunpack.c.l.b16 %v265
    %v268 = vpack.c.b16 %v267, %v267
    %269 = vrot.lane.b32.xlu0 %v268, 64
    %v270 = vpop.permute.xlu0 %269
    %s272 = scalar_lea.vmem [#allocation9], 4
    %273 = vst.msk [vmem:[%s272] sm:$0xf] %vm159, %v270
    %v274 = vld [vmem:[#allocation7] sm:$0xf]
    %v275 = vld [vmem:[#allocation7 + $0x4] sm:$0xf]
    %v276 = vld [vmem:[#allocation7 + $0x8] sm:$0xf]
    %v277 = vld [vmem:[#allocation7 + $0xc] sm:$0xf]
    %s278 = scalar_lea.vmem [#allocation4], 8
    %v279 = vld [vmem:[%s278] sm:$0xf]
    %v280 = vunpack.c.l.bf16 %v279
    %v281 = vld [vmem:[#allocation2] sm:$0xff]
    %v282 = vpack.c.bf16 %v281, %v281
    %v287 = vunpack.c.l.b16 %v274
    %v288 = vunpack.c.l.b16 %v275
    %v289 = vunpack.c.l.b16 %v276
    %v290 = vunpack.c.l.b16 %v277
    %v291 = vpack.c.b16 %v288, %v287
    %v292 = vpack.c.b16 %v290, %v289
    %v296 = vsel %vm68, %v282, 0
    %298 = vmatprep.subr.bf16.mxu0 0
    %299 = vmatpush1.bf16.msra.mxu0 0
    %300 = vmatprep.subr.bf16.mxu0 0
    %301 = vmatpush1.bf16.msra.mxu0 0
    %302 = vmatprep.subr.bf16.mxu0 0
    %303 = vmatpush1.bf16.msra.mxu0 0
    %304 = vmatprep.subr.bf16.mxu0 0
    %305 = vmatpush1.bf16.msra.mxu0 0
    %306 = vmatprep.subr.bf16.mxu0 0
    %307 = vmatpush1.bf16.msra.mxu0 0
    %308 = vmatprep.subr.bf16.mxu0 0
    %309 = vmatpush1.bf16.msra.mxu0 0
    %310 = vmatprep.subr.bf16.mxu0 0
    %311 = vmatpush1.bf16.msra.mxu0 %v292
    %312 = vmatprep.subr.bf16.mxu0 0
    %313 = vmatpush1.bf16.msra.mxu0 %v291
    %314 = vmatprep.subr.bf16.mxu0 0
    %315 = vmatpush2.bf16.msra.mxu0 0
    %316 = vmatprep.subr.bf16.mxu0 0
    %317 = vmatpush2.bf16.msra.mxu0 0
    %318 = vmatprep.subr.bf16.mxu0 0
    %319 = vmatpush2.bf16.msra.mxu0 0
    %320 = vmatprep.subr.bf16.mxu0 0
    %321 = vmatpush2.bf16.msra.mxu0 0
    %322 = vmatprep.subr.bf16.mxu0 0
    %323 = vmatpush2.bf16.msra.mxu0 0
    %324 = vmatprep.subr.bf16.mxu0 0
    %325 = vmatpush2.bf16.msra.mxu0 0
    %326 = vmatprep.subr.bf16.mxu0 0
    %327 = vmatpush2.bf16.msra.mxu0 0
    %328 = vmatprep.subr.bf16.mxu0 0
    %329 = vmatpush2.bf16.msra.mxu0 0
    %330 = vmatprep.mubr.bf16.mxu0 0
    %331 = vmatmul.mubr.bf16.gmra.mxu0 %v296
    %v332 = vpop.f32.mrf.mxu0
    %v333 = vadd.f32 0.0, %v332
    %v334 = vpop.f32.mrf.mxu0
    %v335 = vpop.f32.mrf.mxu0
    %v336 = vpop.f32.mrf.mxu0
    %337 = vdwg.mxu0
    %v338 = vadd.f32 %v280, %v333
    %v339 = vxor.u32 %v338, 2147483648
    %v340 = vmul.f32 %v339, 1.442695
    %v341 = vpow.pop %v340
    %v342 = vadd.f32 %v341, 1.0
    %v343 = vrcp.pop %v342
    %v344 = vmul.f32 1.0, %v343
    %v345 = vtanh.pop %v338
    %v346 = vld [vmem:[#allocation3] sm:$0xff]
    %348 = vrot.lane.b32.xlu0 %v346, 32
    %v349 = vpop.permute.xlu0 %348
    %v351 = vmul.f32 %v344, %v349
    %353 = vrot.lane.b32.xlu0 %v345, 32
    %v354 = vpop.permute.xlu0 %353
    %v356 = vmul.f32 %v344, %v354
    %358 = vrot.lane.b32.xlu0 %v356, 32
    %v359 = vpop.permute.xlu0 %358
    %v361 = vadd.f32 %v351, %v359
    %v362 = vtanh.pop %v361
    %364 = vrot.lane.b32.xlu0 %v362, 32
    %v365 = vpop.permute.xlu0 %364
    %v367 = vmul.f32 %v344, %v365
    %369 = vrot.lane.b32.xlu0 %v361, 96
    %v370 = vpop.permute.xlu0 %369
    %372 = vst.msk [vmem:[#allocation3] sm:$0xff] %vm68, %v370
    %374 = vrot.lane.b32.xlu0 %v367, 64
    %v375 = vpop.permute.xlu0 %374
    %377 = vst.msk [vmem:[#allocation2] sm:$0xff] %vm68, %v375
    %v378 = vpack.c.bf16 %v367, %v367
    %v380 = vunpack.c.l.b16 %v378
    %v381 = vpack.c.b16 %v380, %v380
    %382 = vrot.lane.b32.xlu0 %v381, 64
    %v383 = vpop.permute.xlu0 %382
    %s385 = scalar_lea.vmem [#allocation9], 8
    %386 = vst.msk [vmem:[%s385] sm:$0xf] %vm159, %v383
    %v387 = vld [vmem:[#allocation7] sm:$0xf]
    %v388 = vld [vmem:[#allocation7 + $0x4] sm:$0xf]
    %v389 = vld [vmem:[#allocation7 + $0x8] sm:$0xf]
    %v390 = vld [vmem:[#allocation7 + $0xc] sm:$0xf]
    %s391 = scalar_lea.vmem [#allocation4], 12
    %v392 = vld [vmem:[%s391] sm:$0xf]
    %v393 = vunpack.c.l.bf16 %v392
    %v394 = vld [vmem:[#allocation2] sm:$0xff]
    %v395 = vpack.c.bf16 %v394, %v394
    %v400 = vunpack.c.l.b16 %v387
    %v401 = vunpack.c.l.b16 %v388
    %v402 = vunpack.c.l.b16 %v389
    %v403 = vunpack.c.l.b16 %v390
    %v404 = vpack.c.b16 %v401, %v400
    %v405 = vpack.c.b16 %v403, %v402
    %v409 = vsel %vm68, %v395, 0
    %411 = vmatprep.subr.bf16.mxu0 0
    %412 = vmatpush1.bf16.msra.mxu0 0
    %413 = vmatprep.subr.bf16.mxu0 0
    %414 = vmatpush1.bf16.msra.mxu0 0
    %415 = vmatprep.subr.bf16.mxu0 0
    %416 = vmatpush1.bf16.msra.mxu0 0
    %417 = vmatprep.subr.bf16.mxu0 0
    %418 = vmatpush1.bf16.msra.mxu0 0
    %419 = vmatprep.subr.bf16.mxu0 0
    %420 = vmatpush1.bf16.msra.mxu0 0
    %421 = vmatprep.subr.bf16.mxu0 0
    %422 = vmatpush1.bf16.msra.mxu0 0
    %423 = vmatprep.subr.bf16.mxu0 0
    %424 = vmatpush1.bf16.msra.mxu0 %v405
    %425 = vmatprep.subr.bf16.mxu0 0
    %426 = vmatpush1.bf16.msra.mxu0 %v404
    %427 = vmatprep.subr.bf16.mxu0 0
    %428 = vmatpush2.bf16.msra.mxu0 0
    %429 = vmatprep.subr.bf16.mxu0 0
    %430 = vmatpush2.bf16.msra.mxu0 0
    %431 = vmatprep.subr.bf16.mxu0 0
    %432 = vmatpush2.bf16.msra.mxu0 0
    %433 = vmatprep.subr.bf16.mxu0 0
    %434 = vmatpush2.bf16.msra.mxu0 0
    %435 = vmatprep.subr.bf16.mxu0 0
    %436 = vmatpush2.bf16.msra.mxu0 0
    %437 = vmatprep.subr.bf16.mxu0 0
    %438 = vmatpush2.bf16.msra.mxu0 0
    %439 = vmatprep.subr.bf16.mxu0 0
    %440 = vmatpush2.bf16.msra.mxu0 0
    %441 = vmatprep.subr.bf16.mxu0 0
    %442 = vmatpush2.bf16.msra.mxu0 0
    %443 = vmatprep.mubr.bf16.mxu0 0
    %444 = vmatmul.mubr.bf16.gmra.mxu0 %v409
    %v445 = vpop.f32.mrf.mxu0
    %v446 = vadd.f32 0.0, %v445
    %v447 = vpop.f32.mrf.mxu0
    %v448 = vpop.f32.mrf.mxu0
    %v449 = vpop.f32.mrf.mxu0
    %450 = vdwg.mxu0
    %v451 = vadd.f32 %v393, %v446
    %v452 = vxor.u32 %v451, 2147483648
    %v453 = vmul.f32 %v452, 1.442695
    %v454 = vpow.pop %v453
    %v455 = vadd.f32 %v454, 1.0
    %v456 = vrcp.pop %v455
    %v457 = vmul.f32 1.0, %v456
    %v458 = vtanh.pop %v451
    %v459 = vld [vmem:[#allocation3] sm:$0xff]
    %461 = vrot.lane.b32.xlu0 %v459, 32
    %v462 = vpop.permute.xlu0 %461
    %v464 = vmul.f32 %v457, %v462
    %466 = vrot.lane.b32.xlu0 %v458, 32
    %v467 = vpop.permute.xlu0 %466
    %v469 = vmul.f32 %v457, %v467
    %471 = vrot.lane.b32.xlu0 %v469, 32
    %v472 = vpop.permute.xlu0 %471
    %v474 = vadd.f32 %v464, %v472
    %v475 = vtanh.pop %v474
    %477 = vrot.lane.b32.xlu0 %v475, 32
    %v478 = vpop.permute.xlu0 %477
    %v480 = vmul.f32 %v457, %v478
    %482 = vrot.lane.b32.xlu0 %v474, 96
    %v483 = vpop.permute.xlu0 %482
    %485 = vst.msk [vmem:[#allocation3] sm:$0xff] %vm68, %v483
    %487 = vrot.lane.b32.xlu0 %v480, 64
    %v488 = vpop.permute.xlu0 %487
    %490 = vst.msk [vmem:[#allocation2] sm:$0xff] %vm68, %v488
    %v491 = vpack.c.bf16 %v480, %v480
    %v493 = vunpack.c.l.b16 %v491
    %v494 = vpack.c.b16 %v493, %v493
    %495 = vrot.lane.b32.xlu0 %v494, 64
    %v496 = vpop.permute.xlu0 %495
    %s498 = scalar_lea.vmem [#allocation9], 12
    %499 = vst.msk [vmem:[%s498] sm:$0xf] %vm159, %v496
    %v500 = vld [vmem:[#allocation7] sm:$0xf]
    %v501 = vld [vmem:[#allocation7 + $0x4] sm:$0xf]
    %v502 = vld [vmem:[#allocation7 + $0x8] sm:$0xf]
    %v503 = vld [vmem:[#allocation7 + $0xc] sm:$0xf]
    %s504 = scalar_lea.vmem [#allocation4], 16
    %v505 = vld [vmem:[%s504] sm:$0xf]
    %v506 = vunpack.c.l.bf16 %v505
    %v507 = vld [vmem:[#allocation2] sm:$0xff]
    %v508 = vpack.c.bf16 %v507, %v507
    %v513 = vunpack.c.l.b16 %v500
    %v514 = vunpack.c.l.b16 %v501
    %v515 = vunpack.c.l.b16 %v502
    %v516 = vunpack.c.l.b16 %v503
    %v517 = vpack.c.b16 %v514, %v513
    %v518 = vpack.c.b16 %v516, %v515
    %v522 = vsel %vm68, %v508, 0
    %524 = vmatprep.subr.bf16.mxu0 0
    %525 = vmatpush1.bf16.msra.mxu0 0
    %526 = vmatprep.subr.bf16.mxu0 0
    %527 = vmatpush1.bf16.msra.mxu0 0
    %528 = vmatprep.subr.bf16.mxu0 0
    %529 = vmatpush1.bf16.msra.mxu0 0
    %530 = vmatprep.subr.bf16.mxu0 0
    %531 = vmatpush1.bf16.msra.mxu0 0
    %532 = vmatprep.subr.bf16.mxu0 0
    %533 = vmatpush1.bf16.msra.mxu0 0
    %534 = vmatprep.subr.bf16.mxu0 0
    %535 = vmatpush1.bf16.msra.mxu0 0
    %536 = vmatprep.subr.bf16.mxu0 0
    %537 = vmatpush1.bf16.msra.mxu0 %v518
    %538 = vmatprep.subr.bf16.mxu0 0
    %539 = vmatpush1.bf16.msra.mxu0 %v517
    %540 = vmatprep.subr.bf16.mxu0 0
    %541 = vmatpush2.bf16.msra.mxu0 0
    %542 = vmatprep.subr.bf16.mxu0 0
    %543 = vmatpush2.bf16.msra.mxu0 0
    %544 = vmatprep.subr.bf16.mxu0 0
    %545 = vmatpush2.bf16.msra.mxu0 0
    %546 = vmatprep.subr.bf16.mxu0 0
    %547 = vmatpush2.bf16.msra.mxu0 0
    %548 = vmatprep.subr.bf16.mxu0 0
    %549 = vmatpush2.bf16.msra.mxu0 0
    %550 = vmatprep.subr.bf16.mxu0 0
    %551 = vmatpush2.bf16.msra.mxu0 0
    %552 = vmatprep.subr.bf16.mxu0 0
    %553 = vmatpush2.bf16.msra.mxu0 0
    %554 = vmatprep.subr.bf16.mxu0 0
    %555 = vmatpush2.bf16.msra.mxu0 0
    %556 = vmatprep.mubr.bf16.mxu0 0
    %557 = vmatmul.mubr.bf16.gmra.mxu0 %v522
    %v558 = vpop.f32.mrf.mxu0
    %v559 = vadd.f32 0.0, %v558
    %v560 = vpop.f32.mrf.mxu0
    %v561 = vpop.f32.mrf.mxu0
    %v562 = vpop.f32.mrf.mxu0
    %563 = vdwg.mxu0
    %v564 = vadd.f32 %v506, %v559
    %v565 = vxor.u32 %v564, 2147483648
    %v566 = vmul.f32 %v565, 1.442695
    %v567 = vpow.pop %v566
    %v568 = vadd.f32 %v567, 1.0
    %v569 = vrcp.pop %v568
    %v570 = vmul.f32 1.0, %v569
    %v571 = vtanh.pop %v564
    %v572 = vld [vmem:[#allocation3] sm:$0xff]
    %574 = vrot.lane.b32.xlu0 %v572, 32
    %v575 = vpop.permute.xlu0 %574
    %v577 = vmul.f32 %v570, %v575
    %579 = vrot.lane.b32.xlu0 %v571, 32
    %v580 = vpop.permute.xlu0 %579
    %v582 = vmul.f32 %v570, %v580
    %584 = vrot.lane.b32.xlu0 %v582, 32
    %v585 = vpop.permute.xlu0 %584
    %v587 = vadd.f32 %v577, %v585
    %v588 = vtanh.pop %v587
    %590 = vrot.lane.b32.xlu0 %v588, 32
    %v591 = vpop.permute.xlu0 %590
    %v593 = vmul.f32 %v570, %v591
    %595 = vrot.lane.b32.xlu0 %v587, 96
    %v596 = vpop.permute.xlu0 %595
    %598 = vst.msk [vmem:[#allocation3] sm:$0xff] %vm68, %v596
    %600 = vrot.lane.b32.xlu0 %v593, 64
    %v601 = vpop.permute.xlu0 %600
    %603 = vst.msk [vmem:[#allocation2] sm:$0xff] %vm68, %v601
    %v604 = vpack.c.bf16 %v593, %v593
    %v606 = vunpack.c.l.b16 %v604
    %v607 = vpack.c.b16 %v606, %v606
    %608 = vrot.lane.b32.xlu0 %v607, 64
    %v609 = vpop.permute.xlu0 %608
    %s611 = scalar_lea.vmem [#allocation9], 16
    %612 = vst.msk [vmem:[%s611] sm:$0xf] %vm159, %v609
    %v613 = vld [vmem:[#allocation7] sm:$0xf]
    %v614 = vld [vmem:[#allocation7 + $0x4] sm:$0xf]
    %v615 = vld [vmem:[#allocation7 + $0x8] sm:$0xf]
    %v616 = vld [vmem:[#allocation7 + $0xc] sm:$0xf]
    %s617 = scalar_lea.vmem [#allocation4], 20
    %v618 = vld [vmem:[%s617] sm:$0xf]
    %v619 = vunpack.c.l.bf16 %v618
    %v620 = vld [vmem:[#allocation2] sm:$0xff]
    %v621 = vpack.c.bf16 %v620, %v620
    %v626 = vunpack.c.l.b16 %v613
    %v627 = vunpack.c.l.b16 %v614
    %v628 = vunpack.c.l.b16 %v615
    %v629 = vunpack.c.l.b16 %v616
    %v630 = vpack.c.b16 %v627, %v626
    %v631 = vpack.c.b16 %v629, %v628
    %v635 = vsel %vm68, %v621, 0
    %637 = vmatprep.subr.bf16.mxu0 0
    %638 = vmatpush1.bf16.msra.mxu0 0
    %639 = vmatprep.subr.bf16.mxu0 0
    %640 = vmatpush1.bf16.msra.mxu0 0
    %641 = vmatprep.subr.bf16.mxu0 0
    %642 = vmatpush1.bf16.msra.mxu0 0
    %643 = vmatprep.subr.bf16.mxu0 0
    %644 = vmatpush1.bf16.msra.mxu0 0
    %645 = vmatprep.subr.bf16.mxu0 0
    %646 = vmatpush1.bf16.msra.mxu0 0
    %647 = vmatprep.subr.bf16.mxu0 0
    %648 = vmatpush1.bf16.msra.mxu0 0
    %649 = vmatprep.subr.bf16.mxu0 0
    %650 = vmatpush1.bf16.msra.mxu0 %v631
    %651 = vmatprep.subr.bf16.mxu0 0
    %652 = vmatpush1.bf16.msra.mxu0 %v630
    %653 = vmatprep.subr.bf16.mxu0 0
    %654 = vmatpush2.bf16.msra.mxu0 0
    %655 = vmatprep.subr.bf16.mxu0 0
    %656 = vmatpush2.bf16.msra.mxu0 0
    %657 = vmatprep.subr.bf16.mxu0 0
    %658 = vmatpush2.bf16.msra.mxu0 0
    %659 = vmatprep.subr.bf16.mxu0 0
    %660 = vmatpush2.bf16.msra.mxu0 0
    %661 = vmatprep.subr.bf16.mxu0 0
    %662 = vmatpush2.bf16.msra.mxu0 0
    %663 = vmatprep.subr.bf16.mxu0 0
    %664 = vmatpush2.bf16.msra.mxu0 0
    %665 = vmatprep.subr.bf16.mxu0 0
    %666 = vmatpush2.bf16.msra.mxu0 0
    %667 = vmatprep.subr.bf16.mxu0 0
    %668 = vmatpush2.bf16.msra.mxu0 0
    %669 = vmatprep.mubr.bf16.mxu0 0
    %670 = vmatmul.mubr.bf16.gmra.mxu0 %v635
    %v671 = vpop.f32.mrf.mxu0
    %v672 = vadd.f32 0.0, %v671
    %v673 = vpop.f32.mrf.mxu0
    %v674 = vpop.f32.mrf.mxu0
    %v675 = vpop.f32.mrf.mxu0
    %676 = vdwg.mxu0
    %v677 = vadd.f32 %v619, %v672
    %v678 = vxor.u32 %v677, 2147483648
    %v679 = vmul.f32 %v678, 1.442695
    %v680 = vpow.pop %v679
    %v681 = vadd.f32 %v680, 1.0
    %v682 = vrcp.pop %v681
    %v683 = vmul.f32 1.0, %v682
    %v684 = vtanh.pop %v677
    %v685 = vld [vmem:[#allocation3] sm:$0xff]
    %687 = vrot.lane.b32.xlu0 %v685, 32
    %v688 = vpop.permute.xlu0 %687
    %v690 = vmul.f32 %v683, %v688
    %692 = vrot.lane.b32.xlu0 %v684, 32
    %v693 = vpop.permute.xlu0 %692
    %v695 = vmul.f32 %v683, %v693
    %697 = vrot.lane.b32.xlu0 %v695, 32
    %v698 = vpop.permute.xlu0 %697
    %v700 = vadd.f32 %v690, %v698
    %v701 = vtanh.pop %v700
    %703 = vrot.lane.b32.xlu0 %v701, 32
    %v704 = vpop.permute.xlu0 %703
    %v706 = vmul.f32 %v683, %v704
    %708 = vrot.lane.b32.xlu0 %v700, 96
    %v709 = vpop.permute.xlu0 %708
    %711 = vst.msk [vmem:[#allocation3] sm:$0xff] %vm68, %v709
    %713 = vrot.lane.b32.xlu0 %v706, 64
    %v714 = vpop.permute.xlu0 %713
    %716 = vst.msk [vmem:[#allocation2] sm:$0xff] %vm68, %v714
    %v717 = vpack.c.bf16 %v706, %v706
    %v719 = vunpack.c.l.b16 %v717
    %v720 = vpack.c.b16 %v719, %v719
    %721 = vrot.lane.b32.xlu0 %v720, 64
    %v722 = vpop.permute.xlu0 %721
    %s724 = scalar_lea.vmem [#allocation9], 20
    %725 = vst.msk [vmem:[%s724] sm:$0xf] %vm159, %v722
    %v726 = vld [vmem:[#allocation7] sm:$0xf]
    %v727 = vld [vmem:[#allocation7 + $0x4] sm:$0xf]
    %v728 = vld [vmem:[#allocation7 + $0x8] sm:$0xf]
    %v729 = vld [vmem:[#allocation7 + $0xc] sm:$0xf]
    %s730 = scalar_lea.vmem [#allocation4], 24
    %v731 = vld [vmem:[%s730] sm:$0xf]
    %v732 = vunpack.c.l.bf16 %v731
    %v733 = vld [vmem:[#allocation2] sm:$0xff]
    %v734 = vpack.c.bf16 %v733, %v733
    %v739 = vunpack.c.l.b16 %v726
    %v740 = vunpack.c.l.b16 %v727
    %v741 = vunpack.c.l.b16 %v728
    %v742 = vunpack.c.l.b16 %v729
    %v743 = vpack.c.b16 %v740, %v739
    %v744 = vpack.c.b16 %v742, %v741
    %v748 = vsel %vm68, %v734, 0
    %750 = vmatprep.subr.bf16.mxu0 0
    %751 = vmatpush1.bf16.msra.mxu0 0
    %752 = vmatprep.subr.bf16.mxu0 0
    %753 = vmatpush1.bf16.msra.mxu0 0
    %754 = vmatprep.subr.bf16.mxu0 0
    %755 = vmatpush1.bf16.msra.mxu0 0
    %756 = vmatprep.subr.bf16.mxu0 0
    %757 = vmatpush1.bf16.msra.mxu0 0
    %758 = vmatprep.subr.bf16.mxu0 0
    %759 = vmatpush1.bf16.msra.mxu0 0
    %760 = vmatprep.subr.bf16.mxu0 0
    %761 = vmatpush1.bf16.msra.mxu0 0
    %762 = vmatprep.subr.bf16.mxu0 0
    %763 = vmatpush1.bf16.msra.mxu0 %v744
    %764 = vmatprep.subr.bf16.mxu0 0
    %765 = vmatpush1.bf16.msra.mxu0 %v743
    %766 = vmatprep.subr.bf16.mxu0 0
    %767 = vmatpush2.bf16.msra.mxu0 0
    %768 = vmatprep.subr.bf16.mxu0 0
    %769 = vmatpush2.bf16.msra.mxu0 0
    %770 = vmatprep.subr.bf16.mxu0 0
    %771 = vmatpush2.bf16.msra.mxu0 0
    %772 = vmatprep.subr.bf16.mxu0 0
    %773 = vmatpush2.bf16.msra.mxu0 0
    %774 = vmatprep.subr.bf16.mxu0 0
    %775 = vmatpush2.bf16.msra.mxu0 0
    %776 = vmatprep.subr.bf16.mxu0 0
    %777 = vmatpush2.bf16.msra.mxu0 0
    %778 = vmatprep.subr.bf16.mxu0 0
    %779 = vmatpush2.bf16.msra.mxu0 0
    %780 = vmatprep.subr.bf16.mxu0 0
    %781 = vmatpush2.bf16.msra.mxu0 0
    %782 = vmatprep.mubr.bf16.mxu0 0
    %783 = vmatmul.mubr.bf16.gmra.mxu0 %v748
    %v784 = vpop.f32.mrf.mxu0
    %v785 = vadd.f32 0.0, %v784
    %v786 = vpop.f32.mrf.mxu0
    %v787 = vpop.f32.mrf.mxu0
    %v788 = vpop.f32.mrf.mxu0
    %789 = vdwg.mxu0
    %v790 = vadd.f32 %v732, %v785
    %v791 = vxor.u32 %v790, 2147483648
    %v792 = vmul.f32 %v791, 1.442695
    %v793 = vpow.pop %v792
    %v794 = vadd.f32 %v793, 1.0
    %v795 = vrcp.pop %v794
    %v796 = vmul.f32 1.0, %v795
    %v797 = vtanh.pop %v790
    %v798 = vld [vmem:[#allocation3] sm:$0xff]
    %800 = vrot.lane.b32.xlu0 %v798, 32
    %v801 = vpop.permute.xlu0 %800
    %v803 = vmul.f32 %v796, %v801
    %805 = vrot.lane.b32.xlu0 %v797, 32
    %v806 = vpop.permute.xlu0 %805
    %v808 = vmul.f32 %v796, %v806
    %810 = vrot.lane.b32.xlu0 %v808, 32
    %v811 = vpop.permute.xlu0 %810
    %v813 = vadd.f32 %v803, %v811
    %v814 = vtanh.pop %v813
    %816 = vrot.lane.b32.xlu0 %v814, 32
    %v817 = vpop.permute.xlu0 %816
    %v819 = vmul.f32 %v796, %v817
    %821 = vrot.lane.b32.xlu0 %v813, 96
    %v822 = vpop.permute.xlu0 %821
    %824 = vst.msk [vmem:[#allocation3] sm:$0xff] %vm68, %v822
    %826 = vrot.lane.b32.xlu0 %v819, 64
    %v827 = vpop.permute.xlu0 %826
    %829 = vst.msk [vmem:[#allocation2] sm:$0xff] %vm68, %v827
    %v830 = vpack.c.bf16 %v819, %v819
    %v832 = vunpack.c.l.b16 %v830
    %v833 = vpack.c.b16 %v832, %v832
    %834 = vrot.lane.b32.xlu0 %v833, 64
    %v835 = vpop.permute.xlu0 %834
    %s837 = scalar_lea.vmem [#allocation9], 24
    %838 = vst.msk [vmem:[%s837] sm:$0xf] %vm159, %v835
    %v839 = vld [vmem:[#allocation7] sm:$0xf]
    %v840 = vld [vmem:[#allocation7 + $0x4] sm:$0xf]
    %v841 = vld [vmem:[#allocation7 + $0x8] sm:$0xf]
    %v842 = vld [vmem:[#allocation7 + $0xc] sm:$0xf]
    %s843 = scalar_lea.vmem [#allocation4], 28
    %v844 = vld [vmem:[%s843] sm:$0xf]
    %v845 = vunpack.c.l.bf16 %v844
    %v846 = vld [vmem:[#allocation2] sm:$0xff]
    %v847 = vpack.c.bf16 %v846, %v846
    %v852 = vunpack.c.l.b16 %v839
    %v853 = vunpack.c.l.b16 %v840
    %v854 = vunpack.c.l.b16 %v841
    %v855 = vunpack.c.l.b16 %v842
    %v856 = vpack.c.b16 %v853, %v852
    %v857 = vpack.c.b16 %v855, %v854
    %v861 = vsel %vm68, %v847, 0
    %863 = vmatprep.subr.bf16.mxu0 0
    %864 = vmatpush1.bf16.msra.mxu0 0
    %865 = vmatprep.subr.bf16.mxu0 0
    %866 = vmatpush1.bf16.msra.mxu0 0
    %867 = vmatprep.subr.bf16.mxu0 0
    %868 = vmatpush1.bf16.msra.mxu0 0
    %869 = vmatprep.subr.bf16.mxu0 0
    %870 = vmatpush1.bf16.msra.mxu0 0
    %871 = vmatprep.subr.bf16.mxu0 0
    %872 = vmatpush1.bf16.msra.mxu0 0
    %873 = vmatprep.subr.bf16.mxu0 0
    %874 = vmatpush1.bf16.msra.mxu0 0
    %875 = vmatprep.subr.bf16.mxu0 0
    %876 = vmatpush1.bf16.msra.mxu0 %v857
    %877 = vmatprep.subr.bf16.mxu0 0
    %878 = vmatpush1.bf16.msra.mxu0 %v856
    %879 = vmatprep.subr.bf16.mxu0 0
    %880 = vmatpush2.bf16.msra.mxu0 0
    %881 = vmatprep.subr.bf16.mxu0 0
    %882 = vmatpush2.bf16.msra.mxu0 0
    %883 = vmatprep.subr.bf16.mxu0 0
    %884 = vmatpush2.bf16.msra.mxu0 0
    %885 = vmatprep.subr.bf16.mxu0 0
    %886 = vmatpush2.bf16.msra.mxu0 0
    %887 = vmatprep.subr.bf16.mxu0 0
    %888 = vmatpush2.bf16.msra.mxu0 0
    %889 = vmatprep.subr.bf16.mxu0 0
    %890 = vmatpush2.bf16.msra.mxu0 0
    %891 = vmatprep.subr.bf16.mxu0 0
    %892 = vmatpush2.bf16.msra.mxu0 0
    %893 = vmatprep.subr.bf16.mxu0 0
    %894 = vmatpush2.bf16.msra.mxu0 0
    %895 = vmatprep.mubr.bf16.mxu0 0
    %896 = vmatmul.mubr.bf16.gmra.mxu0 %v861
    %v897 = vpop.f32.mrf.mxu0
    %v898 = vadd.f32 0.0, %v897
    %v899 = vpop.f32.mrf.mxu0
    %v900 = vpop.f32.mrf.mxu0
    %v901 = vpop.f32.mrf.mxu0
    %902 = vdwg.mxu0
    %v903 = vadd.f32 %v845, %v898
    %v904 = vxor.u32 %v903, 2147483648
    %v905 = vmul.f32 %v904, 1.442695
    %v906 = vpow.pop %v905
    %v907 = vadd.f32 %v906, 1.0
    %v908 = vrcp.pop %v907
    %v909 = vmul.f32 1.0, %v908
    %v910 = vtanh.pop %v903
    %v911 = vld [vmem:[#allocation3] sm:$0xff]
    %913 = vrot.lane.b32.xlu0 %v911, 32
    %v914 = vpop.permute.xlu0 %913
    %v916 = vmul.f32 %v909, %v914
    %918 = vrot.lane.b32.xlu0 %v910, 32
    %v919 = vpop.permute.xlu0 %918
    %v921 = vmul.f32 %v909, %v919
    %923 = vrot.lane.b32.xlu0 %v921, 32
    %v924 = vpop.permute.xlu0 %923
    %v926 = vadd.f32 %v916, %v924
    %v927 = vtanh.pop %v926
    %929 = vrot.lane.b32.xlu0 %v927, 32
    %v930 = vpop.permute.xlu0 %929
    %v932 = vmul.f32 %v909, %v930
    %934 = vrot.lane.b32.xlu0 %v926, 96
    %v935 = vpop.permute.xlu0 %934
    %937 = vst.msk [vmem:[#allocation3] sm:$0xff] %vm68, %v935
    %939 = vrot.lane.b32.xlu0 %v932, 64
    %v940 = vpop.permute.xlu0 %939
    %942 = vst.msk [vmem:[#allocation2] sm:$0xff] %vm68, %v940
    %v943 = vpack.c.bf16 %v932, %v932
    %v945 = vunpack.c.l.b16 %v943
    %v946 = vpack.c.b16 %v945, %v945
    %947 = vrot.lane.b32.xlu0 %v946, 64
    %v948 = vpop.permute.xlu0 %947
    %s950 = scalar_lea.vmem [#allocation9], 28
    %951 = vst.msk [vmem:[%s950] sm:$0xf] %vm159, %v948
    // Predicated region
    $region22: #{tpu_custom_call.1} parent=1 // pred_check
      _
    $region23: #{tpu_custom_call.1} parent=1 // pred_check_branch
      %953 = sbr.rel (0) target = $region25
    $region24: #{tpu_custom_call.1} parent=1 // pred_region
      %s955 = ssub.s32 512, 512
      %956 = vsyncadd [#allocation6], %s955
      %s957 = sshll.u32 [#allocation9], 4
      %s958 = int_to_ptr.vmem [resolvable:$true] %s957
      %963 = dma.vmem_to_hbm [thread:$0]  %s958, 512, %s2, [#allocation6], 64, 64, 4
    $region25: #{tpu_custom_call.1} parent=1 // pred_fallthru
      _
    // Predicated region
    $region26: #{tpu_custom_call.1} parent=1 // pred_check
      _
    $region27: #{tpu_custom_call.1} parent=1 // pred_check_branch
      %965 = sbr.rel (0) target = $region29
    $region28: #{tpu_custom_call.1} parent=1 // pred_region
      %966 = dma.done [#allocation6], 512
    $region29: #{tpu_custom_call.1} parent=1 // pred_fallthru
      _
    %967 = vsyncpa [#allocation5], 1
    %968 = vsyncpa [#allocation8], 1
    %969 = vsyncpa [#allocation6], 1

</llo_original>
